<compile_context>
chip_gen: v7x
topology: tpu7x:2x2x1
jax: 0.10.0
libtpu: 0.0.40
codegen_flags: <defaults>
</compile_context>

<pallas_src>
import functools
import math

import jax
import jax.numpy as jnp
from jax.experimental import pallas as pl
from jax.experimental.pallas import tpu as pltpu


_VMEM_TILE_BUDGET = 40 * 1024 * 1024     # conservative: fits v7x's 64 MiB physical VMEM
_BATCHED_DOT_OK = [None]                 # probed once at first call


def _choose_tiles(n_heads, ch, seq_len, itemsize):
    """Pick (heads per grid step, query tile) that fit the VMEM budget."""
    tq_cands = [seq_len] + [t for t in (512, 256, 128)
                            if t < seq_len and seq_len % t == 0]
    hb_cands = [h for h in range(min(n_heads, 16), 0, -1) if n_heads % h == 0]

    def vmem_cost(hb, tq):
        io = 2 * hb * ch * (2 * seq_len + 2 * tq) * itemsize   # double-buffered q,k,v,out
        scores = int(2.5 * hb * tq * seq_len * 4)              # f32 scores + exp temporary
        return io + scores

    for tq in tq_cands:
        for hb in hb_cands:
            if vmem_cost(hb, tq) <= _VMEM_TILE_BUDGET:
                return hb, tq
    # TODO(synk): for extreme T even (1, 128) may not fit; that regime needs a
    # flash-style online-softmax over kv tiles, which UNet resolutions do not reach.
    return 1, tq_cands[-1]


def _attn_kernel(q_ref, k_ref, v_ref, o_ref, *, scale_sq, hb, ch, batched_dot):
    tq = q_ref.shape[-1]
    t_kv = k_ref.shape[-1]
    # blocks are [1,1,Hb,C,*] (new order) or [1,Hb,1,C,*] (legacy); drop unit dims.
    q = q_ref[...].reshape(hb, ch, tq)      # [Hb, C, Tq]
    k = k_ref[...].reshape(hb, ch, t_kv)    # [Hb, C, T]
    v = v_ref[...].reshape(hb, ch, t_kv)    # [Hb, C, T]

    # both ch**-0.25 scales folded into one multiply on q, in the input dtype.
    q = q * scale_sq

    if batched_dot:
        # scores[h, t, s] = sum_c q[h, c, t] * k[h, c, s]  (contract channel axis)
        s = jax.lax.dot_general(q, k, (((1,), (1,)), ((0,), (0,))),
                                preferred_element_type=jnp.float32)      # [Hb, Tq, T] f32
        s = s - jnp.max(s, axis=-1, keepdims=True)
        p = jnp.exp(s)
        p = p * pl.reciprocal(jnp.sum(p, axis=-1, keepdims=True), approx=True)
        p = p.astype(v.dtype)
        # out[h, c, t] = sum_s v[h, c, s] * p[h, t, s]
        o = jax.lax.dot_general(v, p, (((2,), (2,)), ((0,), (0,))),
                                preferred_element_type=jnp.float32)      # [Hb, C, Tq]
        o_ref[0] = o.astype(o_ref.dtype)
    else:
        # Fallback for Mosaic builds without the batched channel-contracted matmul:
        # statically unrolled per-head 2D dots (2D transpose of the small q tile only).
        for h in range(hb):
            s = jnp.dot(q[h].T, k[h], preferred_element_type=jnp.float32)   # [Tq, T]
            s = s - jnp.max(s, axis=-1, keepdims=True)
            p = jnp.exp(s)
            p = p * pl.reciprocal(jnp.sum(p, axis=-1, keepdims=True), approx=True)
            p = p.astype(v.dtype)
            o = jax.lax.dot_general(v[h], p, (((1,), (1,)), ((), ())),
                                    preferred_element_type=jnp.float32)     # [C, Tq]
            o_ref[0, h] = o.astype(o_ref.dtype)


def qkv_attention(qkv, n_heads, *, new_order=False):
    """Packed-QKV multi-head attention matching unet.py.

    qkv: [N, 3*H*C, T].  new_order=True  -> QKVAttention   (q|k|v blocks of H*C)
                         new_order=False -> QKVAttentionLegacy (per-head q|k|v of C)
    Returns [N, H*C, T] in qkv.dtype.
    """
    n, width, t = qkv.shape
    assert width % (3 * n_heads) == 0
    ch = width // (3 * n_heads)
    scale_sq = 1.0 / math.sqrt(ch)                      # == (ch ** -0.25) ** 2
    hb, tq = _choose_tiles(n_heads, ch, t, jnp.dtype(qkv.dtype).itemsize)

    if new_order:    # QKVAttention layout: [N, 3, H, C, T]
        qkv5 = qkv.reshape(n, 3, n_heads, ch, t)
        q_blk, kv_blk = (1, 1, hb, ch, tq), (1, 1, hb, ch, t)
        q_map = lambda ni, hi, ti: (ni, 0, hi, 0, ti)
        k_map = lambda ni, hi, ti: (ni, 1, hi, 0, 0)
        v_map = lambda ni, hi, ti: (ni, 2, hi, 0, 0)
    else:            # QKVAttentionLegacy layout: [N, H, 3, C, T]
        qkv5 = qkv.reshape(n, n_heads, 3, ch, t)
        q_blk, kv_blk = (1, hb, 1, ch, tq), (1, hb, 1, ch, t)
        q_map = lambda ni, hi, ti: (ni, hi, 0, 0, ti)
        k_map = lambda ni, hi, ti: (ni, hi, 1, 0, 0)
        v_map = lambda ni, hi, ti: (ni, hi, 2, 0, 0)

    grid = (n, n_heads // hb, t // tq)   # query-tile axis last: k/v blocks stay resident

    def run(batched_dot):
        kernel = functools.partial(_attn_kernel, scale_sq=scale_sq, hb=hb, ch=ch,
                                   batched_dot=batched_dot)
        return pl.pallas_call(
            kernel,
            out_shape=jax.ShapeDtypeStruct((n, n_heads, ch, t), qkv.dtype),
            grid=grid,
            in_specs=[pl.BlockSpec(q_blk, q_map),
                      pl.BlockSpec(kv_blk, k_map),
                      pl.BlockSpec(kv_blk, v_map)],
            out_specs=pl.BlockSpec((1, hb, ch, tq), lambda ni, hi, ti: (ni, hi, 0, ti)),
            compiler_params=pltpu.CompilerParams(
                dimension_semantics=("parallel", "parallel", "parallel"),
                vmem_limit_bytes=64 * 1024 * 1024),
        )(qkv5, qkv5, qkv5)

    if _BATCHED_DOT_OK[0] is None:
        try:
            out = jax.block_until_ready(run(True))
            _BATCHED_DOT_OK[0] = True
        except Exception:            # older Mosaic: fall back to per-head 2D dots
            _BATCHED_DOT_OK[0] = False
            out = run(False)
    else:
        out = run(_BATCHED_DOT_OK[0])

    return out.reshape(n, n_heads * ch, t)


# ----------------------- AttentionBlock glue (thin XLA ops) -----------------------
# TODO(synk): GroupNorm, the 1x1 conv projections and the residual add are left to
# XLA (bandwidth-bound pointwise/matmul ops); `checkpoint` is a training-time
# rematerialization detail with no effect on forward values.

def _group_norm(x, gamma, beta, *, groups=32, eps=1e-5):
    n, c, t = x.shape
    g = min(groups, c)
    assert c % g == 0
    xf = x.astype(jnp.float32).reshape(n, g, c // g, t)
    mean = xf.mean(axis=(2, 3), keepdims=True)
    var = jnp.mean((xf - mean) ** 2, axis=(2, 3), keepdims=True)
    xn = ((xf - mean) * jax.lax.rsqrt(var + eps)).reshape(n, c, t)
    return (xn * gamma[None, :, None] + beta[None, :, None]).astype(x.dtype)


def attention_block_forward(x, params, num_heads, *, use_new_attention_order=False,
                            attention_fn=None):
    """AttentionBlock._forward: norm -> qkv conv -> attention -> proj -> residual."""
    if attention_fn is None:
        attention_fn = qkv_attention
    b, c = x.shape[0], x.shape[1]
    xf = x.reshape(b, c, -1)
    h = _group_norm(xf, params["norm_w"], params["norm_b"])
    qkv = jnp.einsum("nct,dc->ndt", h, params["qkv_w"]) + params["qkv_b"][None, :, None]
    a = attention_fn(qkv, num_heads, new_order=use_new_attention_order)
    proj = jnp.einsum("nct,dc->ndt", a, params["proj_w"]) + params["proj_b"][None, :, None]
    return (xf + proj).reshape(x.shape)


# ------------------------------- pure-JAX reference -------------------------------

def _attention_ref(qkv, n_heads, *, new_order=False):
    bs, width, length = qkv.shape
    ch = width // (3 * n_heads)
    scale = 1.0 / math.sqrt(math.sqrt(ch))
    if new_order:
        q, k, v = jnp.split(qkv, 3, axis=1)
        q = q.reshape(bs * n_heads, ch, length)
        k = k.reshape(bs * n_heads, ch, length)
        v = v.reshape(bs * n_heads, ch, length)
    else:
        r = qkv.reshape(bs * n_heads, 3 * ch, length)
        q, k, v = r[:, :ch], r[:, ch:2 * ch], r[:, 2 * ch:]
    w = jnp.einsum("bct,bcs->bts", q * scale, k * scale)
    w = jax.nn.softmax(w.astype(jnp.float32), axis=-1).astype(qkv.dtype)
    a = jnp.einsum("bts,bcs->bct", w, v)
    return a.reshape(bs, -1, length)


if __name__ == "__main__":
    key = jax.random.PRNGKey(0)
    k_x, k_g, k_b, k_qkv, k_proj, k_attn = jax.random.split(key, 6)

    # AttentionBlock config: channels=64, num_heads=2 (32 ch/head), 8x8 spatial -> T=64.
    N, C, S, H = 2, 64, 8, 2
    x = jax.random.normal(k_x, (N, C, S, S), jnp.float32)
    params = {
        "norm_w": 1.0 + 0.1 * jax.random.normal(k_g, (C,), jnp.float32),
        "norm_b": 0.05 * jax.random.normal(k_b, (C,), jnp.float32),
        "qkv_w": jax.random.normal(k_qkv, (3 * C, C), jnp.float32) / math.sqrt(C),
        "qkv_b": jnp.zeros((3 * C,), jnp.float32),
        # NOTE: PyTorch zero-initializes proj_out (zero_module); small random weights
        # are used here so the attention path actually contributes to the tested output.
        "proj_w": 0.5 * jax.random.normal(k_proj, (C, C), jnp.float32) / math.sqrt(C),
        "proj_b": jnp.zeros((C,), jnp.float32),
    }

    # 1) raw packed-QKV attention, both channel orders (Legacy and new).
    qkv = jax.random.normal(k_attn, (N, 3 * C, S * S), jnp.float32)
    for new_order in (False, True):
        got = jax.block_until_ready(qkv_attention(qkv, H, new_order=new_order))
        want = _attention_ref(qkv, H, new_order=new_order)
        assert got.shape == want.shape
        assert jnp.allclose(got, want, atol=1e-2, rtol=1e-2), \
            f"attention mismatch (new_order={new_order})"

    # 2) full AttentionBlock forward (default legacy attention order).
    got_blk = jax.block_until_ready(attention_block_forward(x, params, H))
    want_blk = attention_block_forward(x, params, H, attention_fn=_attention_ref)
    assert got_blk.shape == x.shape
    assert jnp.allclose(got_blk, want_blk, atol=1e-2, rtol=1e-2), "AttentionBlock mismatch"

    # 3) bf16 path: operands stay bf16 on the MXU, softmax/accumulation in f32.
    qkv16 = qkv.astype(jnp.bfloat16)
    got16 = jax.block_until_ready(qkv_attention(qkv16, H)).astype(jnp.float32)
    want16 = _attention_ref(qkv16, H).astype(jnp.float32)
    assert jnp.allclose(got16, want16, atol=7.5e-2, rtol=7.5e-2), "bf16 attention mismatch"

    print("KERNEL_OK")
</pallas_src>

<mosaic_0001>
module attributes {stable_mosaic.version = 11 : i64} {
  func.func @_attn_kernel(%arg0: i32, %arg1: i32, %arg2: i32, %arg3: memref<1x2x1x32x64xf32, #tpu.memory_space<vmem>>, %arg4: memref<1x2x1x32x64xf32, #tpu.memory_space<vmem>>, %arg5: memref<1x2x1x32x64xf32, #tpu.memory_space<vmem>>, %arg6: memref<1x2x32x64xf32, #tpu.memory_space<vmem>>) attributes {dimension_semantics = [#tpu.dimension_semantics<parallel>, #tpu.dimension_semantics<parallel>, #tpu.dimension_semantics<parallel>], iteration_bounds = array<i64: 2, 1, 1>, scalar_prefetch = 0 : i64, scratch_operands = 0 : i64, tpu.core_type = #tpu.core_type<tc>, window_params = [{transform_indices = @transform_0, window_bounds = array<i64: 1, 2, 1, 32, 64>}, {transform_indices = @transform_1, window_bounds = array<i64: 1, 2, 1, 32, 64>}, {transform_indices = @transform_2, window_bounds = array<i64: 1, 2, 1, 32, 64>}, {transform_indices = @transform_3, window_bounds = array<i64: 1, 2, 32, 64>}]} {
    %c0 = arith.constant 0 : index
    %c0_0 = arith.constant 0 : index
    %c0_1 = arith.constant 0 : index
    %c0_2 = arith.constant 0 : index
    %c0_3 = arith.constant 0 : index
    %0 = vector.load %arg3[%c0, %c0_0, %c0_1, %c0_2, %c0_3] : memref<1x2x1x32x64xf32, #tpu.memory_space<vmem>>, vector<1x2x1x32x64xf32>
    %1 = vector.shape_cast %0 : vector<1x2x1x32x64xf32> to vector<2x32x64xf32>
    %c0_4 = arith.constant 0 : index
    %c0_5 = arith.constant 0 : index
    %c0_6 = arith.constant 0 : index
    %c0_7 = arith.constant 0 : index
    %c0_8 = arith.constant 0 : index
    %2 = vector.load %arg4[%c0_4, %c0_5, %c0_6, %c0_7, %c0_8] : memref<1x2x1x32x64xf32, #tpu.memory_space<vmem>>, vector<1x2x1x32x64xf32>
    %3 = vector.shape_cast %2 : vector<1x2x1x32x64xf32> to vector<2x32x64xf32>
    %c0_9 = arith.constant 0 : index
    %c0_10 = arith.constant 0 : index
    %c0_11 = arith.constant 0 : index
    %c0_12 = arith.constant 0 : index
    %c0_13 = arith.constant 0 : index
    %4 = vector.load %arg5[%c0_9, %c0_10, %c0_11, %c0_12, %c0_13] : memref<1x2x1x32x64xf32, #tpu.memory_space<vmem>>, vector<1x2x1x32x64xf32>
    %5 = vector.shape_cast %4 : vector<1x2x1x32x64xf32> to vector<2x32x64xf32>
    %cst = arith.constant 0.176776692 : f32
    %6 = vector.broadcast %cst : f32 to vector<2x32x64xf32>
    %7 = arith.mulf %1, %6 : vector<2x32x64xf32>
    %cst_14 = arith.constant dense<0.000000e+00> : vector<2x64x64xf32>
    %8 = tpu.matmul %7, %3, %cst_14 {dimension_numbers = #tpu.dot_dimension_numbers<[1], [1], [2], [2], [0, 0, 0, 2, 1, 2], [0], [0]>} : vector<2x32x64xf32>, vector<2x32x64xf32>, vector<2x64x64xf32> -> vector<2x64x64xf32>
    %cst_15 = arith.constant dense<0xFF800000> : vector<2x64xf32>
    %9 = vector.multi_reduction <maximumf>, %8, %cst_15 [2] : vector<2x64x64xf32> to vector<2x64xf32>
    %10 = vector.shape_cast %9 : vector<2x64xf32> to vector<2x64x1xf32>
    %11 = vector.broadcast %10 : vector<2x64x1xf32> to vector<2x64x64xf32>
    %12 = arith.subf %8, %11 : vector<2x64x64xf32>
    %13 = math.exp %12 : vector<2x64x64xf32>
    %cst_16 = arith.constant dense<0.000000e+00> : vector<2x64xf32>
    %14 = vector.multi_reduction <add>, %13, %cst_16 [2] : vector<2x64x64xf32> to vector<2x64xf32>
    %15 = vector.shape_cast %14 : vector<2x64xf32> to vector<2x64x1xf32>
    %16 = tpu.reciprocal %15 {approx = true} : vector<2x64x1xf32> -> vector<2x64x1xf32>
    %17 = vector.broadcast %16 : vector<2x64x1xf32> to vector<2x64x64xf32>
    %18 = arith.mulf %13, %17 : vector<2x64x64xf32>
    %cst_17 = arith.constant dense<0.000000e+00> : vector<2x32x64xf32>
    %19 = tpu.matmul %5, %18, %cst_17 {dimension_numbers = #tpu.dot_dimension_numbers<[2], [2], [1], [1], [0, 0, 0, 1, 1, 1], [0], [0]>} : vector<2x32x64xf32>, vector<2x64x64xf32>, vector<2x32x64xf32> -> vector<2x32x64xf32>
    %c0_18 = arith.constant 0 : index
    %c0_19 = arith.constant 0 : index
    %c0_20 = arith.constant 0 : index
    %c0_21 = arith.constant 0 : index
    %20 = vector.load %arg6[%c0_18, %c0_19, %c0_20, %c0_21] : memref<1x2x32x64xf32, #tpu.memory_space<vmem>>, vector<1x2x32x64xf32>
    %21 = vector.shape_cast %20 : vector<1x2x32x64xf32> to vector<2x32x64xf32>
    %22 = vector.shape_cast %19 : vector<2x32x64xf32> to vector<1x2x32x64xf32>
    tpu.vector_store %arg6[%c0_18, %c0_19, %c0_20, %c0_21], %22 {strides = array<i32>} : memref<1x2x32x64xf32, #tpu.memory_space<vmem>>, vector<1x2x32x64xf32>,
    return
  }
  func.func @transform_0(%arg0: i32, %arg1: i32, %arg2: i32) -> (i32, i32, i32, i32, i32) {
    %c0_i32 = arith.constant 0 : i32
    %c0_i32_0 = arith.constant 0 : i32
    %c0_i32_1 = arith.constant 0 : i32
    return %arg0, %arg1, %c0_i32, %c0_i32_0, %arg2 : i32, i32, i32, i32, i32
  }
  func.func @transform_1(%arg0: i32, %arg1: i32, %arg2: i32) -> (i32, i32, i32, i32, i32) {
    %c1_i32 = arith.constant 1 : i32
    %c0_i32 = arith.constant 0 : i32
    %c0_i32_0 = arith.constant 0 : i32
    %c0_i32_1 = arith.constant 0 : i32
    return %arg0, %arg1, %c1_i32, %c0_i32, %c0_i32_0 : i32, i32, i32, i32, i32
  }
  func.func @transform_2(%arg0: i32, %arg1: i32, %arg2: i32) -> (i32, i32, i32, i32, i32) {
    %c2_i32 = arith.constant 2 : i32
    %c0_i32 = arith.constant 0 : i32
    %c0_i32_0 = arith.constant 0 : i32
    %c0_i32_1 = arith.constant 0 : i32
    return %arg0, %arg1, %c2_i32, %c0_i32, %c0_i32_0 : i32, i32, i32, i32, i32
  }
  func.func @transform_3(%arg0: i32, %arg1: i32, %arg2: i32) -> (i32, i32, i32, i32) {
    %c0_i32 = arith.constant 0 : i32
    %c0_i32_0 = arith.constant 0 : i32
    return %arg0, %arg1, %c0_i32, %arg2 : i32, i32, i32, i32
  }
}

module attributes {stable_mosaic.version = 11 : i64} {
  func.func @_attn_kernel(%arg0: i32, %arg1: i32, %arg2: i32, %arg3: memref<1x2x1x32x64xf32, #tpu.memory_space<vmem>>, %arg4: memref<1x2x1x32x64xf32, #tpu.memory_space<vmem>>, %arg5: memref<1x2x1x32x64xf32, #tpu.memory_space<vmem>>, %arg6: memref<1x2x32x64xf32, #tpu.memory_space<vmem>>) attributes {dimension_semantics = [#tpu.dimension_semantics<parallel>, #tpu.dimension_semantics<parallel>, #tpu.dimension_semantics<parallel>], iteration_bounds = array<i64: 2, 1, 1>, scalar_prefetch = 0 : i64, scratch_operands = 0 : i64, tpu.core_type = #tpu.core_type<tc>, window_params = [{transform_indices = @transform_0, window_bounds = array<i64: 1, 2, 1, 32, 64>}, {transform_indices = @transform_1, window_bounds = array<i64: 1, 2, 1, 32, 64>}, {transform_indices = @transform_2, window_bounds = array<i64: 1, 2, 1, 32, 64>}, {transform_indices = @transform_3, window_bounds = array<i64: 1, 2, 32, 64>}]} {
    %c0 = arith.constant 0 : index
    %c0_0 = arith.constant 0 : index
    %c0_1 = arith.constant 0 : index
    %c0_2 = arith.constant 0 : index
    %c0_3 = arith.constant 0 : index
    %0 = vector.load %arg3[%c0, %c0_0, %c0_1, %c0_2, %c0_3] : memref<1x2x1x32x64xf32, #tpu.memory_space<vmem>>, vector<1x2x1x32x64xf32>
    %1 = vector.shape_cast %0 : vector<1x2x1x32x64xf32> to vector<2x32x64xf32>
    %c0_4 = arith.constant 0 : index
    %c0_5 = arith.constant 0 : index
    %c0_6 = arith.constant 0 : index
    %c0_7 = arith.constant 0 : index
    %c0_8 = arith.constant 0 : index
    %2 = vector.load %arg4[%c0_4, %c0_5, %c0_6, %c0_7, %c0_8] : memref<1x2x1x32x64xf32, #tpu.memory_space<vmem>>, vector<1x2x1x32x64xf32>
    %3 = vector.shape_cast %2 : vector<1x2x1x32x64xf32> to vector<2x32x64xf32>
    %c0_9 = arith.constant 0 : index
    %c0_10 = arith.constant 0 : index
    %c0_11 = arith.constant 0 : index
    %c0_12 = arith.constant 0 : index
    %c0_13 = arith.constant 0 : index
    %4 = vector.load %arg5[%c0_9, %c0_10, %c0_11, %c0_12, %c0_13] : memref<1x2x1x32x64xf32, #tpu.memory_space<vmem>>, vector<1x2x1x32x64xf32>
    %5 = vector.shape_cast %4 : vector<1x2x1x32x64xf32> to vector<2x32x64xf32>
    %cst = arith.constant 0.176776692 : f32
    %6 = vector.broadcast %cst : f32 to vector<2x32x64xf32>
    %7 = arith.mulf %1, %6 : vector<2x32x64xf32>
    %8 = vector.extract_strided_slice %7 {offsets = [0, 0, 0], sizes = [1, 32, 64], strides = [1, 1, 1]} : vector<2x32x64xf32> to vector<1x32x64xf32>
    %9 = vector.shape_cast %8 : vector<1x32x64xf32> to vector<32x64xf32>
    %10 = tpu.transpose %9, [1, 0] : vector<32x64xf32> -> vector<64x32xf32>
    %11 = vector.extract_strided_slice %3 {offsets = [0, 0, 0], sizes = [1, 32, 64], strides = [1, 1, 1]} : vector<2x32x64xf32> to vector<1x32x64xf32>
    %12 = vector.shape_cast %11 : vector<1x32x64xf32> to vector<32x64xf32>
    %cst_14 = arith.constant dense<0.000000e+00> : vector<64x64xf32>
    %13 = tpu.matmul %10, %12, %cst_14 {dimension_numbers = #tpu.dot_dimension_numbers<[1], [0], [0], [1], [0, 0, 1, 1], [], []>} : vector<64x32xf32>, vector<32x64xf32>, vector<64x64xf32> -> vector<64x64xf32>
    %cst_15 = arith.constant dense<0xFF800000> : vector<64xf32>
    %14 = vector.multi_reduction <maximumf>, %13, %cst_15 [1] : vector<64x64xf32> to vector<64xf32>
    %15 = vector.shape_cast %14 : vector<64xf32> to vector<64x1xf32>
    %16 = vector.broadcast %15 : vector<64x1xf32> to vector<64x64xf32>
    %17 = arith.subf %13, %16 : vector<64x64xf32>
    %18 = math.exp %17 : vector<64x64xf32>
    %cst_16 = arith.constant dense<0.000000e+00> : vector<64xf32>
    %19 = vector.multi_reduction <add>, %18, %cst_16 [1] : vector<64x64xf32> to vector<64xf32>
    %20 = vector.shape_cast %19 : vector<64xf32> to vector<64x1xf32>
    %21 = tpu.reciprocal %20 {approx = true} : vector<64x1xf32> -> vector<64x1xf32>
    %22 = vector.broadcast %21 : vector<64x1xf32> to vector<64x64xf32>
    %23 = arith.mulf %18, %22 : vector<64x64xf32>
    %24 = vector.extract_strided_slice %5 {offsets = [0, 0, 0], sizes = [1, 32, 64], strides = [1, 1, 1]} : vector<2x32x64xf32> to vector<1x32x64xf32>
    %25 = vector.shape_cast %24 : vector<1x32x64xf32> to vector<32x64xf32>
    %cst_17 = arith.constant dense<0.000000e+00> : vector<32x64xf32>
    %26 = tpu.matmul %25, %23, %cst_17 {dimension_numbers = #tpu.dot_dimension_numbers<[1], [1], [0], [0], [0, 0, 1, 0], [], []>} : vector<32x64xf32>, vector<64x64xf32>, vector<32x64xf32> -> vector<32x64xf32>
    %c0_18 = arith.constant 0 : index
    %c0_19 = arith.constant 0 : index
    %c0_20 = arith.constant 0 : index
    %c0_21 = arith.constant 0 : index
    %27 = vector.load %arg6[%c0_18, %c0_19, %c0_20, %c0_21] : memref<1x2x32x64xf32, #tpu.memory_space<vmem>>, vector<1x1x32x64xf32>
    %28 = vector.shape_cast %27 : vector<1x1x32x64xf32> to vector<32x64xf32>
    %29 = vector.shape_cast %26 : vector<32x64xf32> to vector<1x1x32x64xf32>
    tpu.vector_store %arg6[%c0_18, %c0_19, %c0_20, %c0_21], %29 {strides = array<i32>} : memref<1x2x32x64xf32, #tpu.memory_space<vmem>>, vector<1x1x32x64xf32>,
    %30 = vector.extract_strided_slice %7 {offsets = [1, 0, 0], sizes = [1, 32, 64], strides = [1, 1, 1]} : vector<2x32x64xf32> to vector<1x32x64xf32>
    %31 = vector.shape_cast %30 : vector<1x32x64xf32> to vector<32x64xf32>
    %32 = tpu.transpose %31, [1, 0] : vector<32x64xf32> -> vector<64x32xf32>
    %33 = vector.extract_strided_slice %3 {offsets = [1, 0, 0], sizes = [1, 32, 64], strides = [1, 1, 1]} : vector<2x32x64xf32> to vector<1x32x64xf32>
    %34 = vector.shape_cast %33 : vector<1x32x64xf32> to vector<32x64xf32>
    %cst_22 = arith.constant dense<0.000000e+00> : vector<64x64xf32>
    %35 = tpu.matmul %32, %34, %cst_22 {dimension_numbers = #tpu.dot_dimension_numbers<[1], [0], [0], [1], [0, 0, 1, 1], [], []>} : vector<64x32xf32>, vector<32x64xf32>, vector<64x64xf32> -> vector<64x64xf32>
    %cst_23 = arith.constant dense<0xFF800000> : vector<64xf32>
    %36 = vector.multi_reduction <maximumf>, %35, %cst_23 [1] : vector<64x64xf32> to vector<64xf32>
    %37 = vector.shape_cast %36 : vector<64xf32> to vector<64x1xf32>
    %38 = vector.broadcast %37 : vector<64x1xf32> to vector<64x64xf32>
    %39 = arith.subf %35, %38 : vector<64x64xf32>
    %40 = math.exp %39 : vector<64x64xf32>
    %cst_24 = arith.constant dense<0.000000e+00> : vector<64xf32>
    %41 = vector.multi_reduction <add>, %40, %cst_24 [1] : vector<64x64xf32> to vector<64xf32>
    %42 = vector.shape_cast %41 : vector<64xf32> to vector<64x1xf32>
    %43 = tpu.reciprocal %42 {approx = true} : vector<64x1xf32> -> vector<64x1xf32>
    %44 = vector.broadcast %43 : vector<64x1xf32> to vector<64x64xf32>
    %45 = arith.mulf %40, %44 : vector<64x64xf32>
    %46 = vector.extract_strided_slice %5 {offsets = [1, 0, 0], sizes = [1, 32, 64], strides = [1, 1, 1]} : vector<2x32x64xf32> to vector<1x32x64xf32>
    %47 = vector.shape_cast %46 : vector<1x32x64xf32> to vector<32x64xf32>
    %cst_25 = arith.constant dense<0.000000e+00> : vector<32x64xf32>
    %48 = tpu.matmul %47, %45, %cst_25 {dimension_numbers = #tpu.dot_dimension_numbers<[1], [1], [0], [0], [0, 0, 1, 0], [], []>} : vector<32x64xf32>, vector<64x64xf32>, vector<32x64xf32> -> vector<32x64xf32>
    %c0_26 = arith.constant 0 : index
    %c1 = arith.constant 1 : index
    %c0_27 = arith.constant 0 : index
    %c0_28 = arith.constant 0 : index
    %49 = vector.load %arg6[%c0_26, %c1, %c0_27, %c0_28] : memref<1x2x32x64xf32, #tpu.memory_space<vmem>>, vector<1x1x32x64xf32>
    %50 = vector.shape_cast %49 : vector<1x1x32x64xf32> to vector<32x64xf32>
    %51 = vector.shape_cast %48 : vector<32x64xf32> to vector<1x1x32x64xf32>
    tpu.vector_store %arg6[%c0_26, %c1, %c0_27, %c0_28], %51 {strides = array<i32>} : memref<1x2x32x64xf32, #tpu.memory_space<vmem>>, vector<1x1x32x64xf32>,
    return
  }
  func.func @transform_0(%arg0: i32, %arg1: i32, %arg2: i32) -> (i32, i32, i32, i32, i32) {
    %c0_i32 = arith.constant 0 : i32
    %c0_i32_0 = arith.constant 0 : i32
    %c0_i32_1 = arith.constant 0 : i32
    return %arg0, %arg1, %c0_i32, %c0_i32_0, %arg2 : i32, i32, i32, i32, i32
  }
  func.func @transform_1(%arg0: i32, %arg1: i32, %arg2: i32) -> (i32, i32, i32, i32, i32) {
    %c1_i32 = arith.constant 1 : i32
    %c0_i32 = arith.constant 0 : i32
    %c0_i32_0 = arith.constant 0 : i32
    %c0_i32_1 = arith.constant 0 : i32
    return %arg0, %arg1, %c1_i32, %c0_i32, %c0_i32_0 : i32, i32, i32, i32, i32
  }
  func.func @transform_2(%arg0: i32, %arg1: i32, %arg2: i32) -> (i32, i32, i32, i32, i32) {
    %c2_i32 = arith.constant 2 : i32
    %c0_i32 = arith.constant 0 : i32
    %c0_i32_0 = arith.constant 0 : i32
    %c0_i32_1 = arith.constant 0 : i32
    return %arg0, %arg1, %c2_i32, %c0_i32, %c0_i32_0 : i32, i32, i32, i32, i32
  }
  func.func @transform_3(%arg0: i32, %arg1: i32, %arg2: i32) -> (i32, i32, i32, i32) {
    %c0_i32 = arith.constant 0 : i32
    %c0_i32_0 = arith.constant 0 : i32
    return %arg0, %arg1, %c0_i32, %arg2 : i32, i32, i32, i32
  }
}

</mosaic_0001>

<llo_original>
// kernel: tpu_custom_call.1
$region0: #{tpu_custom_call.1}
  #allocation0 [shape = 'u32[]', space=smem, size = 0x4, offset = 0x4, fixed_abs, tag = 'smem constant byte address 0x4 - core index']
  #allocation1 [shape = 'u32[144,128]{1,0:T(1,128)}', space=vmem, size = 0x12000, scoped, tag = 'internal scratch']
  #allocation9 [shape = 's32[]', space=sflag, size = 0x4, offset = 0, fixed_abs, tag = 'sflag constant byte address 0x0 - dummy sync flag']
  #allocation11 [shape = 's32[]', space=sflag, size = 0x4, offset = 0, fixed_abs, tag = 'sflag constant byte address 0x0 - dummy sync flag']
  #allocation13 [shape = 's32[]', space=sflag, size = 0x4, offset = 0, fixed_abs, tag = 'sflag constant byte address 0x0 - dummy sync flag']
  %s0 = inlined_call_operand.hbm [shape: f32[2,2,3,32,64], index: 0, kind: input, shape index: {}]
  %s1 = inlined_call_operand.hbm [shape: f32[2,2,3,32,64], index: 1, kind: input, shape index: {}]
  %s2 = inlined_call_operand.hbm [shape: f32[2,2,3,32,64], index: 2, kind: input, shape index: {}]
  %s3 = inlined_call_operand.hbm [shape: f32[2,2,32,64], index: 3, kind: output, shape index: {}]
  %s4 = sld [smem:[#allocation0]]
  $region57: #{tpu_custom_call.1} parent=0
    _
  %s6 = ssub.s32 1, %s4
  %s7 = scalar_select 0, %s6, %s4
  $region1: #{tpu_custom_call.1} parent=0
    #allocation2 [shape = 'u8[65536]{0}', space=vmem, size = 0x10000, scoped, tag = 'input window, operand 0']
    #allocation3 [shape = 's32[2]{0}', space=sflag, size = 0x8, scoped, tag = 'scoped memory for tpu_custom_call.1']
    #allocation4 [shape = 's32[2]{0}', space=sflag, size = 0x8, scoped, tag = 'scoped memory for tpu_custom_call.1']
    #allocation5 [shape = 'u8[65536]{0}', space=vmem, size = 0x10000, scoped, tag = 'input window, operand 1']
    #allocation6 [shape = 's32[2]{0}', space=sflag, size = 0x8, scoped, tag = 'scoped memory for tpu_custom_call.1']
    #allocation7 [shape = 'u8[65536]{0}', space=vmem, size = 0x10000, scoped, tag = 'input window, operand 2']
    #allocation8 [shape = 'u8[65536]{0}', space=vmem, size = 0x10000, scoped, tag = 'output window, operand 0']
    %8 = vsyncpa [#allocation3], 0
    %s9 = scalar_lea.sflag [#allocation3], 1
    %10 = vsyncpa %s9, 0
    %11 = vsyncpa [#allocation6], 0
    %s12 = scalar_lea.sflag [#allocation6], 1
    %13 = vsyncpa %s12, 0
    %14 = vsyncpa [#allocation4], 0
    %s15 = scalar_lea.sflag [#allocation4], 1
    %16 = vsyncpa %s15, 0
    loop: start=0, step=1, limit=4
    $region2: #{tpu_custom_call.1} parent=1 // loop_pre_header
      _
    $region3: #{tpu_custom_call.1} parent=1 // loop_header
      %s18 = sphi 0, %s22
      %p19 = scmp.ge.s32.totalorder %s18, 4
      %s25 = sphi 0, %s44
      %s26 = sphi 0, %s40
      %s27 = sphi 0, %s36
      %s28 = sphi 0, %s25
      %s29 = sphi 0, %s26
      %s30 = sphi 0, %s27
      %s31 = sphi 0, %s28
      %s32 = sphi 0, %s29
      %s33 = sphi 0, %s30
      %s51 = sphi 0, %s53
      %s54 = sphi 0, %s51
      %s55 = sphi 0, %s54
      %s71 = sphi 0, %s55
      %s79 = sphi 0, %s81
      %s82 = sphi 0, %s79
      %s83 = sphi 0, %s82
      %s99 = sphi 0, %s83
      %s107 = sphi 0, %s109
      %s110 = sphi 0, %s107
      %s111 = sphi 0, %s110
      %s127 = sphi 0, %s111
      %s137 = sphi 0, %s139
      %s140 = sphi 0, %s137
      %s141 = sphi 0, %s140
      %s157 = sphi 0, %s141
    $region4: #{tpu_custom_call.1} parent=1 // loop_header_branch
      %21 = sbr.rel (%p19) target = $region8
    $region5: #{tpu_custom_call.1} parent=1 // loop_body
      %s23 = ssub.s32 %s18, 1
      %s24 = ssub.s32 %s18, 2
      %s34 = sadd.s32 1, %s27
      %p35 = scmp.ge.s32.totalorder %s34, 1
      %s36 = scalar_select %p35, 0, %s34
      %s37 = sadd.s32 1, %s26
      %s38 = scalar_select %p35, %s37, %s26
      %p39 = scmp.ge.s32.totalorder %s38, 1
      %s40 = scalar_select %p39, 0, %s38
      %s41 = sadd.s32 1, %s25
      %s42 = scalar_select %p39, %s41, %s25
      %p43 = scmp.ge.s32.totalorder %s42, 2
      %s44 = scalar_select %p43, 0, %s42
      %s45 = ssub.s32 %s25, %s44
      %s46 = ssub.s32 %s26, %s40
      %s47 = sor.u32 %s45, %s46
      %s48 = ssub.s32 %s27, %s36
      %s49 = sor.u32 %s47, %s48
      %p50 = scmp.eq.s32.totalorder %s49, 0
      %s52 = sadd.s32 %s51, 1
      %s53 = scalar_select %p50, %s51, %s52
      %p56 = pneg %p50
      %p57 = scmp.eq.s32.totalorder %s18, 1
      %p58 = por %p56, %p57
      %p59 = scmp.ne.s32.totalorder %s51, %s54
      %p60 = scmp.eq.s32.totalorder %s18, 0
      %p61 = por %p59, %p60
      %p62 = scmp.ne.s32.totalorder %s51, %s54
      %p63 = scmp.eq.s32.totalorder %s23, 1
      %p64 = por %p62, %p63
      %p65 = scmp.ne.s32.totalorder %s54, %s55
      %p66 = scmp.eq.s32.totalorder %s23, 0
      %p67 = por %p65, %p66
      %p68 = scmp.ne.s32.totalorder %s54, %s55
      %p69 = scmp.eq.s32.totalorder %s24, 1
      %p70 = por %p68, %p69
      %p72 = scmp.ne.s32.totalorder %s55, %s71
      %p73 = scmp.eq.s32.totalorder %s24, 0
      %p74 = por %p72, %p73
      %s75 = ssub.s32 %s25, %s44
      %s76 = ssub.s32 %s26, %s40
      %s77 = sor.u32 %s75, %s76
      %p78 = scmp.eq.s32.totalorder %s77, 0
      %s80 = sadd.s32 %s79, 1
      %s81 = scalar_select %p78, %s79, %s80
      %p84 = pneg %p78
      %p85 = scmp.eq.s32.totalorder %s18, 1
      %p86 = por %p84, %p85
      %p87 = scmp.ne.s32.totalorder %s79, %s82
      %p88 = scmp.eq.s32.totalorder %s18, 0
      %p89 = por %p87, %p88
      %p90 = scmp.ne.s32.totalorder %s79, %s82
      %p91 = scmp.eq.s32.totalorder %s23, 1
      %p92 = por %p90, %p91
      %p93 = scmp.ne.s32.totalorder %s82, %s83
      %p94 = scmp.eq.s32.totalorder %s23, 0
      %p95 = por %p93, %p94
      %p96 = scmp.ne.s32.totalorder %s82, %s83
      %p97 = scmp.eq.s32.totalorder %s24, 1
      %p98 = por %p96, %p97
      %p100 = scmp.ne.s32.totalorder %s83, %s99
      %p101 = scmp.eq.s32.totalorder %s24, 0
      %p102 = por %p100, %p101
      %s103 = ssub.s32 %s25, %s44
      %s104 = ssub.s32 %s26, %s40
      %s105 = sor.u32 %s103, %s104
      %p106 = scmp.eq.s32.totalorder %s105, 0
      %s108 = sadd.s32 %s107, 1
      %s109 = scalar_select %p106, %s107, %s108
      %p112 = pneg %p106
      %p113 = scmp.eq.s32.totalorder %s18, 1
      %p114 = por %p112, %p113
      %p115 = scmp.ne.s32.totalorder %s107, %s110
      %p116 = scmp.eq.s32.totalorder %s18, 0
      %p117 = por %p115, %p116
      %p118 = scmp.ne.s32.totalorder %s107, %s110
      %p119 = scmp.eq.s32.totalorder %s23, 1
      %p120 = por %p118, %p119
      %p121 = scmp.ne.s32.totalorder %s110, %s111
      %p122 = scmp.eq.s32.totalorder %s23, 0
      %p123 = por %p121, %p122
      %p124 = scmp.ne.s32.totalorder %s110, %s111
      %p125 = scmp.eq.s32.totalorder %s24, 1
      %p126 = por %p124, %p125
      %p128 = scmp.ne.s32.totalorder %s111, %s127
      %p129 = scmp.eq.s32.totalorder %s24, 0
      %p130 = por %p128, %p129
      %s131 = ssub.s32 %s25, %s44
      %s132 = ssub.s32 %s26, %s40
      %s133 = sor.u32 %s131, %s132
      %s134 = ssub.s32 %s27, %s36
      %s135 = sor.u32 %s133, %s134
      %p136 = scmp.eq.s32.totalorder %s135, 0
      %s138 = sadd.s32 %s137, 1
      %s139 = scalar_select %p136, %s137, %s138
      %p142 = pneg %p136
      %p143 = scmp.eq.s32.totalorder %s18, 1
      %p144 = por %p142, %p143
      %p145 = scmp.ne.s32.totalorder %s137, %s140
      %p146 = scmp.eq.s32.totalorder %s18, 0
      %p147 = por %p145, %p146
      %p148 = scmp.ne.s32.totalorder %s137, %s140
      %p149 = scmp.eq.s32.totalorder %s23, 1
      %p150 = por %p148, %p149
      %p151 = scmp.ne.s32.totalorder %s140, %s141
      %p152 = scmp.eq.s32.totalorder %s23, 0
      %p153 = por %p151, %p152
      %p154 = scmp.ne.s32.totalorder %s140, %s141
      %p155 = scmp.eq.s32.totalorder %s24, 1
      %p156 = por %p154, %p155
      %p158 = scmp.ne.s32.totalorder %s141, %s157
      %p159 = scmp.eq.s32.totalorder %s24, 0
      %p160 = por %p158, %p159
      %p161 = scmp.le.s32.totalorder 1, %s18
      %p162 = scmp.lt.s32.totalorder %s18, 3
      %p163 = pnand %p161, %p162
      %p164 = pneg %p163
      // Predicated region
      $region9: #{tpu_custom_call.1} parent=5 // pred_check
        _
      $region10: #{tpu_custom_call.1} parent=5 // pred_check_branch
        %166 = sbr.rel (%p163) target = $region12
      $region11: #{tpu_custom_call.1} parent=5 // pred_region
        %s167 = ssub.s32 %s18, 1
      $region12: #{tpu_custom_call.1} parent=5 // pred_fallthru
        _
      %p168 = scmp.lt.s32.totalorder %s18, 2
      // Predicated region
      $region13: #{tpu_custom_call.1} parent=5 // pred_check
        %p169 = pneg %p168
      $region14: #{tpu_custom_call.1} parent=5 // pred_check_branch
        %171 = sbr.rel (%p169) target = $region16
      $region15: #{tpu_custom_call.1} parent=5 // pred_region
        // Predicated region
        $region17: #{tpu_custom_call.1} parent=15 // pred_check
          %p172 = pneg %p61
        $region18: #{tpu_custom_call.1} parent=15 // pred_check_branch
          %174 = sbr.rel (%p172) target = $region20
        $region19: #{tpu_custom_call.1} parent=15 // pred_region
          #allocation10 [shape = 'u32[6]{0}', space=smem, size = 0x18, scoped, tag = 'DMA stride descriptor']
          %s175 = sand.u32 %s51, 1
          %s176 = scalar_lea.sflag [#allocation3], %s175
          %s177 = sand.u32 %s51, 1
          %s178 = smul.addr %s177, 64
          %s179 = scalar_lea.vmem [#allocation2], %s178
          %s180 = smul.u32 2, %s26
          %s182 = ssub.s32 1024, 1024
          %183 = vsyncadd %s176, %s182
          %s184 = smul.addr %s180, 12
          %s185 = sadd.s32 %s27, %s184
          %s186 = smul.addr %s25, 24
          %s187 = sadd.s32 %s185, %s186
          %s188 = smul.addr %s187, 128
          %s189 = scalar_lea.hbm %s0, %s188
          %s191 = sshll.u32 1, 14
          %s192 = sxor.u32 4294967295, %s191
          %s194 = sld [smem:[#allocation0]]
          %s195 = sadd.s32 2, %s194
          %s197 = sshll.u32 7, 26
          %s198 = sxor.u32 4294967295, %s197
          %s199 = sand.u32 0, %s198
          %s200 = sshll.u32 %s195, 26
          %s201 = sor.u32 %s199, %s200
          %s202 = sshll.u32 %s179, 4
          %s203 = int_to_ptr.vmem [resolvable:$true] %s202
          %209 = sst [smem:[#allocation10]] 1536
          %s210 = scalar_lea.smem [#allocation10], 1
          %211 = sst [smem:[%s210]] 512
          %s212 = scalar_lea.smem [#allocation10], 2
          %213 = sst [smem:[%s212]] 4
          %s214 = scalar_lea.smem [#allocation10], 3
          %215 = sst [smem:[%s214]] 128
          %s216 = scalar_lea.smem [#allocation10], 4
          %217 = sst [smem:[%s216]] 128
          %s218 = scalar_lea.smem [#allocation10], 5
          %219 = sst [smem:[%s218]] 8
          %221 = dma.general %s189, 1024, %s203, %s176, [#allocation9], [#allocation10], %s201, 0
        $region20: #{tpu_custom_call.1} parent=15 // pred_fallthru
          _
        // Predicated region
        $region21: #{tpu_custom_call.1} parent=15 // pred_check
          %p222 = pneg %p89
        $region22: #{tpu_custom_call.1} parent=15 // pred_check_branch
          %224 = sbr.rel (%p222) target = $region24
        $region23: #{tpu_custom_call.1} parent=15 // pred_region
          #allocation12 [shape = 'u32[6]{0}', space=smem, size = 0x18, scoped, tag = 'DMA stride descriptor']
          %s225 = sand.u32 %s18, 1
          %s226 = scalar_lea.sflag [#allocation6], %s225
          %s227 = sand.u32 %s79, 1
          %s228 = smul.addr %s227, 64
          %s229 = scalar_lea.vmem [#allocation5], %s228
          %s230 = smul.u32 2, %s26
          %s232 = ssub.s32 1024, 1024
          %233 = vsyncadd %s226, %s232
          %s234 = smul.addr %s230, 12
          %s235 = sadd.s32 4, %s234
          %s236 = smul.addr %s25, 24
          %s237 = sadd.s32 %s235, %s236
          %s238 = smul.addr %s237, 128
          %s239 = scalar_lea.hbm %s1, %s238
          %s241 = sshll.u32 1, 14
          %s242 = sxor.u32 4294967295, %s241
          %s244 = sld [smem:[#allocation0]]
          %s245 = sadd.s32 2, %s244
          %s247 = sshll.u32 7, 26
          %s248 = sxor.u32 4294967295, %s247
          %s249 = sand.u32 0, %s248
          %s250 = sshll.u32 %s245, 26
          %s251 = sor.u32 %s249, %s250
          %s252 = sshll.u32 %s229, 4
          %s253 = int_to_ptr.vmem [resolvable:$true] %s252
          %259 = sst [smem:[#allocation12]] 1536
          %s260 = scalar_lea.smem [#allocation12], 1
          %261 = sst [smem:[%s260]] 512
          %s262 = scalar_lea.smem [#allocation12], 2
          %263 = sst [smem:[%s262]] 4
          %s264 = scalar_lea.smem [#allocation12], 3
          %265 = sst [smem:[%s264]] 128
          %s266 = scalar_lea.smem [#allocation12], 4
          %267 = sst [smem:[%s266]] 128
          %s268 = scalar_lea.smem [#allocation12], 5
          %269 = sst [smem:[%s268]] 8
          %271 = dma.general %s239, 1024, %s253, %s226, [#allocation11], [#allocation12], %s251, 0
        $region24: #{tpu_custom_call.1} parent=15 // pred_fallthru
          _
        // Predicated region
        $region25: #{tpu_custom_call.1} parent=15 // pred_check
          %p272 = pneg %p117
        $region26: #{tpu_custom_call.1} parent=15 // pred_check_branch
          %274 = sbr.rel (%p272) target = $region28
        $region27: #{tpu_custom_call.1} parent=15 // pred_region
          #allocation14 [shape = 'u32[6]{0}', space=smem, size = 0x18, scoped, tag = 'DMA stride descriptor']
          %s275 = sand.u32 %s18, 1
          %s276 = scalar_lea.sflag [#allocation6], %s275
          %s277 = sand.u32 %s107, 1
          %s278 = smul.addr %s277, 64
          %s279 = scalar_lea.vmem [#allocation7], %s278
          %s280 = smul.u32 2, %s26
          %s282 = ssub.s32 1024, 1024
          %283 = vsyncadd %s276, %s282
          %s284 = smul.addr %s280, 12
          %s285 = sadd.s32 8, %s284
          %s286 = smul.addr %s25, 24
          %s287 = sadd.s32 %s285, %s286
          %s288 = smul.addr %s287, 128
          %s289 = scalar_lea.hbm %s2, %s288
          %s291 = sshll.u32 1, 14
          %s292 = sxor.u32 4294967295, %s291
          %s294 = sld [smem:[#allocation0]]
          %s295 = sadd.s32 2, %s294
          %s297 = sshll.u32 7, 26
          %s298 = sxor.u32 4294967295, %s297
          %s299 = sand.u32 0, %s298
          %s300 = sshll.u32 %s295, 26
          %s301 = sor.u32 %s299, %s300
          %s302 = sshll.u32 %s279, 4
          %s303 = int_to_ptr.vmem [resolvable:$true] %s302
          %309 = sst [smem:[#allocation14]] 1536
          %s310 = scalar_lea.smem [#allocation14], 1
          %311 = sst [smem:[%s310]] 512
          %s312 = scalar_lea.smem [#allocation14], 2
          %313 = sst [smem:[%s312]] 4
          %s314 = scalar_lea.smem [#allocation14], 3
          %315 = sst [smem:[%s314]] 128
          %s316 = scalar_lea.smem [#allocation14], 4
          %317 = sst [smem:[%s316]] 128
          %s318 = scalar_lea.smem [#allocation14], 5
          %319 = sst [smem:[%s318]] 8
          %321 = dma.general %s289, 1024, %s303, %s276, [#allocation13], [#allocation14], %s301, 0
        $region28: #{tpu_custom_call.1} parent=15 // pred_fallthru
          _
      $region16: #{tpu_custom_call.1} parent=5 // pred_fallthru
        _
      %p322 = scmp.le.s32.totalorder 1, %s18
      %p323 = scmp.lt.s32.totalorder %s18, 3
      %p324 = pnand %p322, %p323
      %p325 = pneg %p324
      // Predicated region
      $region29: #{tpu_custom_call.1} parent=5 // pred_check
        _
      $region30: #{tpu_custom_call.1} parent=5 // pred_check_branch
        %327 = sbr.rel (%p324) target = $region32
      $region31: #{tpu_custom_call.1} parent=5 // pred_region
        %s328 = ssub.s32 %s18, 1
        %s329 = sand.u32 %s54, 1
        %s330 = scalar_lea.sflag [#allocation3], %s329
        %s331 = sand.u32 %s54, 1
        %s332 = smul.addr %s331, 64
        %s333 = scalar_lea.vmem [#allocation2], %s332
        // Predicated region
        $region33: #{tpu_custom_call.1} parent=31 // pred_check
          %p334 = pneg %p67
        $region34: #{tpu_custom_call.1} parent=31 // pred_check_branch
          %336 = sbr.rel (%p334) target = $region36
        $region35: #{tpu_custom_call.1} parent=31 // pred_region
          %337 = dma.done %s330, 1024
        $region36: #{tpu_custom_call.1} parent=31 // pred_fallthru
          _
        %s338 = sand.u32 %s23, 1
        %s339 = scalar_lea.sflag [#allocation6], %s338
        %s340 = sand.u32 %s82, 1
        %s341 = smul.addr %s340, 64
        %s342 = scalar_lea.vmem [#allocation5], %s341
        // Predicated region
        $region37: #{tpu_custom_call.1} parent=31 // pred_check
          %p343 = pneg %p95
        $region38: #{tpu_custom_call.1} parent=31 // pred_check_branch
          %345 = sbr.rel (%p343) target = $region40
        $region39: #{tpu_custom_call.1} parent=31 // pred_region
          %346 = dma.done %s339, 1024
        $region40: #{tpu_custom_call.1} parent=31 // pred_fallthru
          _
        %s347 = sand.u32 %s23, 1
        %s348 = scalar_lea.sflag [#allocation6], %s347
        %s349 = sand.u32 %s110, 1
        %s350 = smul.addr %s349, 64
        %s351 = scalar_lea.vmem [#allocation7], %s350
        // Predicated region
        $region41: #{tpu_custom_call.1} parent=31 // pred_check
          %p352 = pneg %p123
        $region42: #{tpu_custom_call.1} parent=31 // pred_check_branch
          %354 = sbr.rel (%p352) target = $region44
        $region43: #{tpu_custom_call.1} parent=31 // pred_region
          %355 = dma.done %s348, 1024
        $region44: #{tpu_custom_call.1} parent=31 // pred_fallthru
          _
        %s356 = sand.u32 %s54, 1
        %s357 = scalar_lea.sflag [#allocation3], %s356
        %s358 = sand.u32 %s54, 1
        %s359 = smul.addr %s358, 64
        %s360 = scalar_lea.vmem [#allocation2], %s359
        %p361 = pneg %p67
        %p362 = pneg %p64
        %s363 = sand.u32 %s23, 1
        %s364 = scalar_lea.sflag [#allocation6], %s363
        %s365 = sand.u32 %s82, 1
        %s366 = smul.addr %s365, 64
        %s367 = scalar_lea.vmem [#allocation5], %s366
        %p368 = pneg %p95
        %p369 = pneg %p92
        %s370 = sand.u32 %s23, 1
        %s371 = scalar_lea.sflag [#allocation6], %s370
        %s372 = sand.u32 %s110, 1
        %s373 = smul.addr %s372, 64
        %s374 = scalar_lea.vmem [#allocation7], %s373
        %p375 = pneg %p123
        %p376 = pneg %p120
        %p377 = pneg %p153
        %p378 = pneg %p150
        %s379 = sand.u32 %s140, 1
        %s380 = scalar_lea.sflag [#allocation4], %s379
        %s381 = sand.u32 %s140, 1
        %s382 = smul.addr %s381, 64
        %s383 = scalar_lea.vmem [#allocation8], %s382
        %s384 = smul.u32 2, %s29
        %s385 = smul.u32 2, %s29
        %s386 = smul.u32 2, %s29
        %s387 = smul.u32 2, %s29
        %v388 = vld [vmem:[%s333] sm:$0xff]
        %v389 = vld [vmem:[%s333 + $0x8] sm:$0xff]
        %v390 = vld [vmem:[%s333 + $0x10] sm:$0xff]
        %v391 = vld [vmem:[%s333 + $0x18] sm:$0xff]
        %v392 = vld [vmem:[%s333 + $0x20] sm:$0xff]
        %v393 = vld [vmem:[%s333 + $0x28] sm:$0xff]
        %v394 = vld [vmem:[%s333 + $0x30] sm:$0xff]
        %v395 = vld [vmem:[%s333 + $0x38] sm:$0xff]
        %v396 = vld [vmem:[%s342] sm:$0xff]
        %v397 = vld [vmem:[%s342 + $0x8] sm:$0xff]
        %v398 = vld [vmem:[%s342 + $0x10] sm:$0xff]
        %v399 = vld [vmem:[%s342 + $0x18] sm:$0xff]
        %v400 = vld [vmem:[%s342 + $0x20] sm:$0xff]
        %v401 = vld [vmem:[%s342 + $0x28] sm:$0xff]
        %v402 = vld [vmem:[%s342 + $0x30] sm:$0xff]
        %v403 = vld [vmem:[%s342 + $0x38] sm:$0xff]
        %v404 = vld [vmem:[%s351] sm:$0xff]
        %v405 = vld [vmem:[%s351 + $0x8] sm:$0xff]
        %v406 = vld [vmem:[%s351 + $0x10] sm:$0xff]
        %v407 = vld [vmem:[%s351 + $0x18] sm:$0xff]
        %v408 = vld [vmem:[%s351 + $0x20] sm:$0xff]
        %v409 = vld [vmem:[%s351 + $0x28] sm:$0xff]
        %v410 = vld [vmem:[%s351 + $0x30] sm:$0xff]
        %v411 = vld [vmem:[%s351 + $0x38] sm:$0xff]
        %v412 = vmul.f32 %v388, 0.17677669
        %v413 = vmul.f32 %v389, 0.17677669
        %v414 = vmul.f32 %v390, 0.17677669
        %v415 = vmul.f32 %v391, 0.17677669
        %v416 = vmul.f32 %v392, 0.17677669
        %v417 = vmul.f32 %v393, 0.17677669
        %v418 = vmul.f32 %v394, 0.17677669
        %v419 = vmul.f32 %v395, 0.17677669
        %420 = vxpose.xlu0.b32.start [1/16] %v412, 128
        %421 = vxpose.xlu0.b32.cont [2/16] %v413, 128
        %422 = vxpose.xlu0.b32.cont [3/16] %v414, 128
        %423 = vxpose.xlu0.b32.cont [4/16] %v415, 128
        %424 = vxpose.xlu0.b32.cont [5/16] 0.0, 128
        %425 = vxpose.xlu0.b32.cont [6/16] 0.0, 128
        %426 = vxpose.xlu0.b32.cont [7/16] 0.0, 128
        %427 = vxpose.xlu0.b32.cont [8/16] 0.0, 128
        %428 = vxpose.xlu0.b32.cont [9/16] 0.0, 128
        %429 = vxpose.xlu0.b32.cont [10/16] 0.0, 128
        %430 = vxpose.xlu0.b32.cont [11/16] 0.0, 128
        %431 = vxpose.xlu0.b32.cont [12/16] 0.0, 128
        %432 = vxpose.xlu0.b32.cont [13/16] 0.0, 128
        %433 = vxpose.xlu0.b32.cont [14/16] 0.0, 128
        %434 = vxpose.xlu0.b32.cont [15/16] 0.0, 128
        %435 = vxpose.xlu0.b32.end [16/16] 0.0, 128
        %v436 = vpop.trf.xlu0
        %v437 = vpop.trf.xlu0
        %v438 = vpop.trf.xlu0
        %v439 = vpop.trf.xlu0
        %v440 = vpop.trf.xlu0
        %v441 = vpop.trf.xlu0
        %v442 = vpop.trf.xlu0
        %v443 = vpop.trf.xlu0
        %v444 = vpop.trf.xlu0
        %v445 = vpop.trf.xlu0
        %v446 = vpop.trf.xlu0
        %v447 = vpop.trf.xlu0
        %v448 = vpop.trf.xlu0
        %v449 = vpop.trf.xlu0
        %v450 = vpop.trf.xlu0
        %v451 = vpop.trf.xlu0
        %vm452 = vcmask 261120
        %v454 = vsel %vm452, %v436, 0
        %v457 = vsel %vm452, %v437, 0
        %v460 = vsel %vm452, %v438, 0
        %v463 = vsel %vm452, %v439, 0
        %v466 = vsel %vm452, %v440, 0
        %v469 = vsel %vm452, %v441, 0
        %v472 = vsel %vm452, %v442, 0
        %v475 = vsel %vm452, %v443, 0
        %477 = vmatprep.subr.mxu0 0.0
        %478 = vmatpush1.msra.mxu0 %v396
        %479 = vmatprep.subr.mxu0 0.0
        %480 = vmatpush1.msra.mxu0 %v397
        %481 = vmatprep.subr.mxu0 0.0
        %482 = vmatpush1.msra.mxu0 %v398
        %483 = vmatprep.subr.mxu0 0.0
        %484 = vmatpush1.msra.mxu0 %v399
        %485 = vmatprep.subr.mxu0 0.0
        %486 = vmatpush1.msra.mxu0 0.0
        %487 = vmatprep.subr.mxu0 0.0
        %488 = vmatpush1.msra.mxu0 0.0
        %489 = vmatprep.subr.mxu0 0.0
        %490 = vmatpush1.msra.mxu0 0.0
        %491 = vmatprep.subr.mxu0 0.0
        %492 = vmatpush1.msra.mxu0 0.0
        %493 = vmatprep.subr.mxu0 0.0
        %494 = vmatpush1.msra.mxu0 0.0
        %495 = vmatprep.subr.mxu0 0.0
        %496 = vmatpush1.msra.mxu0 0.0
        %497 = vmatprep.subr.mxu0 0.0
        %498 = vmatpush1.msra.mxu0 0.0
        %499 = vmatprep.subr.mxu0 0.0
        %500 = vmatpush1.msra.mxu0 0.0
        %501 = vmatprep.subr.mxu0 0.0
        %502 = vmatpush1.msra.mxu0 0.0
        %503 = vmatprep.subr.mxu0 0.0
        %504 = vmatpush1.msra.mxu0 0.0
        %505 = vmatprep.subr.mxu0 0.0
        %506 = vmatpush1.msra.mxu0 0.0
        %507 = vmatprep.subr.mxu0 0.0
        %508 = vmatpush1.msra.mxu0 0.0
        %509 = vmatprep.subr.mxu0 0.0
        %510 = vmatpush1.msra.mxu0 0.0
        %511 = vmatprep.subr.mxu0 0.0
        %512 = vmatpush1.msra.mxu0 0.0
        %513 = vmatprep.subr.mxu0 0.0
        %514 = vmatpush1.msra.mxu0 0.0
        %515 = vmatprep.subr.mxu0 0.0
        %516 = vmatpush1.msra.mxu0 0.0
        %517 = vmatprep.subr.mxu0 0.0
        %518 = vmatpush1.msra.mxu0 0.0
        %519 = vmatprep.subr.mxu0 0.0
        %520 = vmatpush1.msra.mxu0 0.0
        %521 = vmatprep.subr.mxu0 0.0
        %522 = vmatpush1.msra.mxu0 0.0
        %523 = vmatprep.subr.mxu0 0.0
        %524 = vmatpush1.msra.mxu0 0.0
        %525 = vmatprep.subr.mxu0 0.0
        %526 = vmatpush1.msra.mxu0 0.0
        %527 = vmatprep.subr.mxu0 0.0
        %528 = vmatpush1.msra.mxu0 0.0
        %529 = vmatprep.subr.mxu0 0.0
        %530 = vmatpush1.msra.mxu0 0.0
        %531 = vmatprep.subr.mxu0 0.0
        %532 = vmatpush1.msra.mxu0 0.0
        %533 = vmatprep.subr.mxu0 0.0
        %534 = vmatpush1.msra.mxu0 0.0
        %535 = vmatprep.subr.mxu0 0.0
        %536 = vmatpush1.msra.mxu0 0.0
        %537 = vmatprep.subr.mxu0 0.0
        %538 = vmatpush1.msra.mxu0 0.0
        %539 = vmatprep.subr.mxu0 0.0
        %540 = vmatpush1.msra.mxu0 0.0
        %541 = vmatprep.mubr.f32.mxu0 0.0
        %542 = vmatmul.mubr.f32.gmra.mrb[0].mxu0 %v454
        %v543 = vpop.f32.mrb[0].mxu0
        %v544 = vadd.f32 0.0, %v543
        %v545 = vpop.f32.mrb[0].mxu0
        %546 = vmatprep.mubr.f32.mxu0 0.0
        %547 = vmatmul.mubr.f32.gmra.mrb[0].mxu0 %v457
        %v548 = vpop.f32.mrb[0].mxu0
        %v549 = vadd.f32 0.0, %v548
        %v550 = vpop.f32.mrb[0].mxu0
        %551 = vmatprep.mubr.f32.mxu0 0.0
        %552 = vmatmul.mubr.f32.gmra.mrb[0].mxu0 %v460
        %v553 = vpop.f32.mrb[0].mxu0
        %v554 = vadd.f32 0.0, %v553
        %v555 = vpop.f32.mrb[0].mxu0
        %556 = vmatprep.mubr.f32.mxu0 0.0
        %557 = vmatmul.mubr.f32.gmra.mrb[0].mxu0 %v463
        %v558 = vpop.f32.mrb[0].mxu0
        %v559 = vadd.f32 0.0, %v558
        %v560 = vpop.f32.mrb[0].mxu0
        %561 = vmatprep.mubr.f32.mxu0 0.0
        %562 = vmatmul.mubr.f32.gmra.mrb[0].mxu0 %v466
        %v563 = vpop.f32.mrb[0].mxu0
        %v564 = vadd.f32 0.0, %v563
        %v565 = vpop.f32.mrb[0].mxu0
        %566 = vmatprep.mubr.f32.mxu0 0.0
        %567 = vmatmul.mubr.f32.gmra.mrb[0].mxu0 %v469
        %v568 = vpop.f32.mrb[0].mxu0
        %v569 = vadd.f32 0.0, %v568
        %v570 = vpop.f32.mrb[0].mxu0
        %571 = vmatprep.mubr.f32.mxu0 0.0
        %572 = vmatmul.mubr.f32.gmra.mrb[0].mxu0 %v472
        %v573 = vpop.f32.mrb[0].mxu0
        %v574 = vadd.f32 0.0, %v573
        %v575 = vpop.f32.mrb[0].mxu0
        %576 = vmatprep.mubr.f32.mxu0 0.0
        %577 = vmatmul.mubr.f32.gmra.mrb[0].mxu0 %v475
        %v578 = vpop.f32.mrb[0].mxu0
        %v579 = vadd.f32 0.0, %v578
        %v580 = vpop.f32.mrb[0].mxu0
        %581 = vdwg.mxu0
        %582 = vxpose.xlu0.b32.start [1/16] %v416, 128
        %583 = vxpose.xlu0.b32.cont [2/16] %v417, 128
        %584 = vxpose.xlu0.b32.cont [3/16] %v418, 128
        %585 = vxpose.xlu0.b32.cont [4/16] %v419, 128
        %586 = vxpose.xlu0.b32.cont [5/16] 0.0, 128
        %587 = vxpose.xlu0.b32.cont [6/16] 0.0, 128
        %588 = vxpose.xlu0.b32.cont [7/16] 0.0, 128
        %589 = vxpose.xlu0.b32.cont [8/16] 0.0, 128
        %590 = vxpose.xlu0.b32.cont [9/16] 0.0, 128
        %591 = vxpose.xlu0.b32.cont [10/16] 0.0, 128
        %592 = vxpose.xlu0.b32.cont [11/16] 0.0, 128
        %593 = vxpose.xlu0.b32.cont [12/16] 0.0, 128
        %594 = vxpose.xlu0.b32.cont [13/16] 0.0, 128
        %595 = vxpose.xlu0.b32.cont [14/16] 0.0, 128
        %596 = vxpose.xlu0.b32.cont [15/16] 0.0, 128
        %597 = vxpose.xlu0.b32.end [16/16] 0.0, 128
        %v598 = vpop.trf.xlu0
        %v599 = vpop.trf.xlu0
        %v600 = vpop.trf.xlu0
        %v601 = vpop.trf.xlu0
        %v602 = vpop.trf.xlu0
        %v603 = vpop.trf.xlu0
        %v604 = vpop.trf.xlu0
        %v605 = vpop.trf.xlu0
        %v606 = vpop.trf.xlu0
        %v607 = vpop.trf.xlu0
        %v608 = vpop.trf.xlu0
        %v609 = vpop.trf.xlu0
        %v610 = vpop.trf.xlu0
        %v611 = vpop.trf.xlu0
        %v612 = vpop.trf.xlu0
        %v613 = vpop.trf.xlu0
        %v615 = vsel %vm452, %v598, 0
        %v618 = vsel %vm452, %v599, 0
        %v621 = vsel %vm452, %v600, 0
        %v624 = vsel %vm452, %v601, 0
        %v627 = vsel %vm452, %v602, 0
        %v630 = vsel %vm452, %v603, 0
        %v633 = vsel %vm452, %v604, 0
        %v636 = vsel %vm452, %v605, 0
        %638 = vmatprep.subr.mxu0 0.0
        %639 = vmatpush1.msra.mxu0 %v400
        %640 = vmatprep.subr.mxu0 0.0
        %641 = vmatpush1.msra.mxu0 %v401
        %642 = vmatprep.subr.mxu0 0.0
        %643 = vmatpush1.msra.mxu0 %v402
        %644 = vmatprep.subr.mxu0 0.0
        %645 = vmatpush1.msra.mxu0 %v403
        %646 = vmatprep.subr.mxu0 0.0
        %647 = vmatpush1.msra.mxu0 0.0
        %648 = vmatprep.subr.mxu0 0.0
        %649 = vmatpush1.msra.mxu0 0.0
        %650 = vmatprep.subr.mxu0 0.0
        %651 = vmatpush1.msra.mxu0 0.0
        %652 = vmatprep.subr.mxu0 0.0
        %653 = vmatpush1.msra.mxu0 0.0
        %654 = vmatprep.subr.mxu0 0.0
        %655 = vmatpush1.msra.mxu0 0.0
        %656 = vmatprep.subr.mxu0 0.0
        %657 = vmatpush1.msra.mxu0 0.0
        %658 = vmatprep.subr.mxu0 0.0
        %659 = vmatpush1.msra.mxu0 0.0
        %660 = vmatprep.subr.mxu0 0.0
        %661 = vmatpush1.msra.mxu0 0.0
        %662 = vmatprep.subr.mxu0 0.0
        %663 = vmatpush1.msra.mxu0 0.0
        %664 = vmatprep.subr.mxu0 0.0
        %665 = vmatpush1.msra.mxu0 0.0
        %666 = vmatprep.subr.mxu0 0.0
        %667 = vmatpush1.msra.mxu0 0.0
        %668 = vmatprep.subr.mxu0 0.0
        %669 = vmatpush1.msra.mxu0 0.0
        %670 = vmatprep.subr.mxu0 0.0
        %671 = vmatpush1.msra.mxu0 0.0
        %672 = vmatprep.subr.mxu0 0.0
        %673 = vmatpush1.msra.mxu0 0.0
        %674 = vmatprep.subr.mxu0 0.0
        %675 = vmatpush1.msra.mxu0 0.0
        %676 = vmatprep.subr.mxu0 0.0
        %677 = vmatpush1.msra.mxu0 0.0
        %678 = vmatprep.subr.mxu0 0.0
        %679 = vmatpush1.msra.mxu0 0.0
        %680 = vmatprep.subr.mxu0 0.0
        %681 = vmatpush1.msra.mxu0 0.0
        %682 = vmatprep.subr.mxu0 0.0
        %683 = vmatpush1.msra.mxu0 0.0
        %684 = vmatprep.subr.mxu0 0.0
        %685 = vmatpush1.msra.mxu0 0.0
        %686 = vmatprep.subr.mxu0 0.0
        %687 = vmatpush1.msra.mxu0 0.0
        %688 = vmatprep.subr.mxu0 0.0
        %689 = vmatpush1.msra.mxu0 0.0
        %690 = vmatprep.subr.mxu0 0.0
        %691 = vmatpush1.msra.mxu0 0.0
        %692 = vmatprep.subr.mxu0 0.0
        %693 = vmatpush1.msra.mxu0 0.0
        %694 = vmatprep.subr.mxu0 0.0
        %695 = vmatpush1.msra.mxu0 0.0
        %696 = vmatprep.subr.mxu0 0.0
        %697 = vmatpush1.msra.mxu0 0.0
        %698 = vmatprep.subr.mxu0 0.0
        %699 = vmatpush1.msra.mxu0 0.0
        %700 = vmatprep.subr.mxu0 0.0
        %701 = vmatpush1.msra.mxu0 0.0
        %702 = vmatprep.mubr.f32.mxu0 0.0
        %703 = vmatmul.mubr.f32.gmra.mrb[0].mxu0 %v615
        %v704 = vpop.f32.mrb[0].mxu0
        %v705 = vadd.f32 0.0, %v704
        %v706 = vpop.f32.mrb[0].mxu0
        %707 = vmatprep.mubr.f32.mxu0 0.0
        %708 = vmatmul.mubr.f32.gmra.mrb[0].mxu0 %v618
        %v709 = vpop.f32.mrb[0].mxu0
        %v710 = vadd.f32 0.0, %v709
        %v711 = vpop.f32.mrb[0].mxu0
        %712 = vmatprep.mubr.f32.mxu0 0.0
        %713 = vmatmul.mubr.f32.gmra.mrb[0].mxu0 %v621
        %v714 = vpop.f32.mrb[0].mxu0
        %v715 = vadd.f32 0.0, %v714
        %v716 = vpop.f32.mrb[0].mxu0
        %717 = vmatprep.mubr.f32.mxu0 0.0
        %718 = vmatmul.mubr.f32.gmra.mrb[0].mxu0 %v624
        %v719 = vpop.f32.mrb[0].mxu0
        %v720 = vadd.f32 0.0, %v719
        %v721 = vpop.f32.mrb[0].mxu0
        %722 = vmatprep.mubr.f32.mxu0 0.0
        %723 = vmatmul.mubr.f32.gmra.mrb[0].mxu0 %v627
        %v724 = vpop.f32.mrb[0].mxu0
        %v725 = vadd.f32 0.0, %v724
        %v726 = vpop.f32.mrb[0].mxu0
        %727 = vmatprep.mubr.f32.mxu0 0.0
        %728 = vmatmul.mubr.f32.gmra.mrb[0].mxu0 %v630
        %v729 = vpop.f32.mrb[0].mxu0
        %v730 = vadd.f32 0.0, %v729
        %v731 = vpop.f32.mrb[0].mxu0
        %732 = vmatprep.mubr.f32.mxu0 0.0
        %733 = vmatmul.mubr.f32.gmra.mrb[0].mxu0 %v633
        %v734 = vpop.f32.mrb[0].mxu0
        %v735 = vadd.f32 0.0, %v734
        %v736 = vpop.f32.mrb[0].mxu0
        %737 = vmatprep.mubr.f32.mxu0 0.0
        %738 = vmatmul.mubr.f32.gmra.mrb[0].mxu0 %v636
        %v739 = vpop.f32.mrb[0].mxu0
        %v740 = vadd.f32 0.0, %v739
        %v741 = vpop.f32.mrb[0].mxu0
        %742 = vdwg.mxu0
        %vm743 = vcmask 523264
        %v744 = vsel %vm743, %v544, -inf
        %745 = vmax.xlane.f32.xlu0 %v744
        %v746 = vpop.xlane.xlu0 %745
        %v747 = vsel %vm743, %v549, -inf
        %748 = vmax.xlane.f32.xlu0 %v747
        %v749 = vpop.xlane.xlu0 %748
        %v750 = vsel %vm743, %v554, -inf
        %751 = vmax.xlane.f32.xlu0 %v750
        %v752 = vpop.xlane.xlu0 %751
        %v753 = vsel %vm743, %v559, -inf
        %754 = vmax.xlane.f32.xlu0 %v753
        %v755 = vpop.xlane.xlu0 %754
        %v756 = vsel %vm743, %v564, -inf
        %757 = vmax.xlane.f32.xlu0 %v756
        %v758 = vpop.xlane.xlu0 %757
        %v759 = vsel %vm743, %v569, -inf
        %760 = vmax.xlane.f32.xlu0 %v759
        %v761 = vpop.xlane.xlu0 %760
        %v762 = vsel %vm743, %v574, -inf
        %763 = vmax.xlane.f32.xlu0 %v762
        %v764 = vpop.xlane.xlu0 %763
        %v765 = vsel %vm743, %v579, -inf
        %766 = vmax.xlane.f32.xlu0 %v765
        %v767 = vpop.xlane.xlu0 %766
        %v768 = vsel %vm743, %v705, -inf
        %769 = vmax.xlane.f32.xlu0 %v768
        %v770 = vpop.xlane.xlu0 %769
        %v771 = vsel %vm743, %v710, -inf
        %772 = vmax.xlane.f32.xlu0 %v771
        %v773 = vpop.xlane.xlu0 %772
        %v774 = vsel %vm743, %v715, -inf
        %775 = vmax.xlane.f32.xlu0 %v774
        %v776 = vpop.xlane.xlu0 %775
        %v777 = vsel %vm743, %v720, -inf
        %778 = vmax.xlane.f32.xlu0 %v777
        %v779 = vpop.xlane.xlu0 %778
        %v780 = vsel %vm743, %v725, -inf
        %781 = vmax.xlane.f32.xlu0 %v780
        %v782 = vpop.xlane.xlu0 %781
        %v783 = vsel %vm743, %v730, -inf
        %784 = vmax.xlane.f32.xlu0 %v783
        %v785 = vpop.xlane.xlu0 %784
        %v786 = vsel %vm743, %v735, -inf
        %787 = vmax.xlane.f32.xlu0 %v786
        %v788 = vpop.xlane.xlu0 %787
        %v789 = vsel %vm743, %v740, -inf
        %790 = vmax.xlane.f32.xlu0 %v789
        %v791 = vpop.xlane.xlu0 %790
        %v792 = vsub.f32 %v544, %v746
        %v793 = vsub.f32 %v549, %v749
        %v794 = vsub.f32 %v554, %v752
        %v795 = vsub.f32 %v559, %v755
        %v796 = vsub.f32 %v564, %v758
        %v797 = vsub.f32 %v569, %v761
        %v798 = vsub.f32 %v574, %v764
        %v799 = vsub.f32 %v579, %v767
        %v800 = vsub.f32 %v705, %v770
        %v801 = vsub.f32 %v710, %v773
        %v802 = vsub.f32 %v715, %v776
        %v803 = vsub.f32 %v720, %v779
        %v804 = vsub.f32 %v725, %v782
        %v805 = vsub.f32 %v730, %v785
        %v806 = vsub.f32 %v735, %v788
        %v807 = vsub.f32 %v740, %v791
        %v808 = vmul.f32 %v792, 1.442695
        %v809 = vpow.pop %v808
        %v810 = vmul.f32 %v793, 1.442695
        %v811 = vpow.pop %v810
        %v812 = vmul.f32 %v794, 1.442695
        %v813 = vpow.pop %v812
        %v814 = vmul.f32 %v795, 1.442695
        %v815 = vpow.pop %v814
        %v816 = vmul.f32 %v796, 1.442695
        %v817 = vpow.pop %v816
        %v818 = vmul.f32 %v797, 1.442695
        %v819 = vpow.pop %v818
        %v820 = vmul.f32 %v798, 1.442695
        %v821 = vpow.pop %v820
        %v822 = vmul.f32 %v799, 1.442695
        %v823 = vpow.pop %v822
        %v824 = vmul.f32 %v800, 1.442695
        %v825 = vpow.pop %v824
        %v826 = vmul.f32 %v801, 1.442695
        %v827 = vpow.pop %v826
        %v828 = vmul.f32 %v802, 1.442695
        %v829 = vpow.pop %v828
        %v830 = vmul.f32 %v803, 1.442695
        %v831 = vpow.pop %v830
        %v832 = vmul.f32 %v804, 1.442695
        %v833 = vpow.pop %v832
        %v834 = vmul.f32 %v805, 1.442695
        %v835 = vpow.pop %v834
        %v836 = vmul.f32 %v806, 1.442695
        %v837 = vpow.pop %v836
        %v838 = vmul.f32 %v807, 1.442695
        %v839 = vpow.pop %v838
        %v840 = vsel %vm743, %v809, 0.0
        %841 = vadd.xlane.f32.xlu0 %v840
        %v842 = vpop.xlane.xlu0 %841
        %v843 = vsel %vm743, %v811, 0.0
        %844 = vadd.xlane.f32.xlu0 %v843
        %v845 = vpop.xlane.xlu0 %844
        %v846 = vsel %vm743, %v813, 0.0
        %847 = vadd.xlane.f32.xlu0 %v846
        %v848 = vpop.xlane.xlu0 %847
        %v849 = vsel %vm743, %v815, 0.0
        %850 = vadd.xlane.f32.xlu0 %v849
        %v851 = vpop.xlane.xlu0 %850
        %v852 = vsel %vm743, %v817, 0.0
        %853 = vadd.xlane.f32.xlu0 %v852
        %v854 = vpop.xlane.xlu0 %853
        %v855 = vsel %vm743, %v819, 0.0
        %856 = vadd.xlane.f32.xlu0 %v855
        %v857 = vpop.xlane.xlu0 %856
        %v858 = vsel %vm743, %v821, 0.0
        %859 = vadd.xlane.f32.xlu0 %v858
        %v860 = vpop.xlane.xlu0 %859
        %v861 = vsel %vm743, %v823, 0.0
        %862 = vadd.xlane.f32.xlu0 %v861
        %v863 = vpop.xlane.xlu0 %862
        %v864 = vsel %vm743, %v825, 0.0
        %865 = vadd.xlane.f32.xlu0 %v864
        %v866 = vpop.xlane.xlu0 %865
        %v867 = vsel %vm743, %v827, 0.0
        %868 = vadd.xlane.f32.xlu0 %v867
        %v869 = vpop.xlane.xlu0 %868
        %v870 = vsel %vm743, %v829, 0.0
        %871 = vadd.xlane.f32.xlu0 %v870
        %v872 = vpop.xlane.xlu0 %871
        %v873 = vsel %vm743, %v831, 0.0
        %874 = vadd.xlane.f32.xlu0 %v873
        %v875 = vpop.xlane.xlu0 %874
        %v876 = vsel %vm743, %v833, 0.0
        %877 = vadd.xlane.f32.xlu0 %v876
        %v878 = vpop.xlane.xlu0 %877
        %v879 = vsel %vm743, %v835, 0.0
        %880 = vadd.xlane.f32.xlu0 %v879
        %v881 = vpop.xlane.xlu0 %880
        %v882 = vsel %vm743, %v837, 0.0
        %883 = vadd.xlane.f32.xlu0 %v882
        %v884 = vpop.xlane.xlu0 %883
        %v885 = vsel %vm743, %v839, 0.0
        %886 = vadd.xlane.f32.xlu0 %v885
        %v887 = vpop.xlane.xlu0 %886
        %v888 = vrcp.pop %v842
        %v889 = vrcp.pop %v845
        %v890 = vrcp.pop %v848
        %v891 = vrcp.pop %v851
        %v892 = vrcp.pop %v854
        %v893 = vrcp.pop %v857
        %v894 = vrcp.pop %v860
        %v895 = vrcp.pop %v863
        %v896 = vrcp.pop %v866
        %v897 = vrcp.pop %v869
        %v898 = vrcp.pop %v872
        %v899 = vrcp.pop %v875
        %v900 = vrcp.pop %v878
        %v901 = vrcp.pop %v881
        %v902 = vrcp.pop %v884
        %v903 = vrcp.pop %v887
        %v904 = vmul.f32 %v809, %v888
        %v905 = vmul.f32 %v811, %v889
        %v906 = vmul.f32 %v813, %v890
        %v907 = vmul.f32 %v815, %v891
        %v908 = vmul.f32 %v817, %v892
        %v909 = vmul.f32 %v819, %v893
        %v910 = vmul.f32 %v821, %v894
        %v911 = vmul.f32 %v823, %v895
        %v912 = vmul.f32 %v825, %v896
        %v913 = vmul.f32 %v827, %v897
        %v914 = vmul.f32 %v829, %v898
        %v915 = vmul.f32 %v831, %v899
        %v916 = vmul.f32 %v833, %v900
        %v917 = vmul.f32 %v835, %v901
        %v918 = vmul.f32 %v837, %v902
        %v919 = vmul.f32 %v839, %v903
        %v921 = vsel %vm743, %v404, 0
        %v924 = vsel %vm743, %v405, 0
        %v927 = vsel %vm743, %v406, 0
        %v930 = vsel %vm743, %v407, 0
        %v933 = vsel %vm743, %v904, 0
        %v936 = vsel %vm743, %v905, 0
        %v939 = vsel %vm743, %v906, 0
        %v942 = vsel %vm743, %v907, 0
        %v945 = vsel %vm743, %v908, 0
        %v948 = vsel %vm743, %v909, 0
        %v951 = vsel %vm743, %v910, 0
        %v954 = vsel %vm743, %v911, 0
        %956 = vmatprep.subr.mxu0 0.0
        %957 = vmatpush1.xpose.msra.mxu0 %v933
        %958 = vmatprep.subr.mxu0 0.0
        %959 = vmatpush1.xpose.msra.mxu0 %v936
        %960 = vmatprep.subr.mxu0 0.0
        %961 = vmatpush1.xpose.msra.mxu0 %v939
        %962 = vmatprep.subr.mxu0 0.0
        %963 = vmatpush1.xpose.msra.mxu0 %v942
        %964 = vmatprep.subr.mxu0 0.0
        %965 = vmatpush1.xpose.msra.mxu0 %v945
        %966 = vmatprep.subr.mxu0 0.0
        %967 = vmatpush1.xpose.msra.mxu0 %v948
        %968 = vmatprep.subr.mxu0 0.0
        %969 = vmatpush1.xpose.msra.mxu0 %v951
        %970 = vmatprep.subr.mxu0 0.0
        %971 = vmatpush1.xpose.msra.mxu0 %v954
        %972 = vmatprep.subr.mxu0 0.0
        %973 = vmatpush1.xpose.msra.mxu0 0.0
        %974 = vmatprep.subr.mxu0 0.0
        %975 = vmatpush1.xpose.msra.mxu0 0.0
        %976 = vmatprep.subr.mxu0 0.0
        %977 = vmatpush1.xpose.msra.mxu0 0.0
        %978 = vmatprep.subr.mxu0 0.0
        %979 = vmatpush1.xpose.msra.mxu0 0.0
        %980 = vmatprep.subr.mxu0 0.0
        %981 = vmatpush1.xpose.msra.mxu0 0.0
        %982 = vmatprep.subr.mxu0 0.0
        %983 = vmatpush1.xpose.msra.mxu0 0.0
        %984 = vmatprep.subr.mxu0 0.0
        %985 = vmatpush1.xpose.msra.mxu0 0.0
        %986 = vmatprep.subr.mxu0 0.0
        %987 = vmatpush1.xpose.msra.mxu0 0.0
        %988 = vmatprep.subr.mxu0 0.0
        %989 = vmatpush1.xpose.msra.mxu0 0.0
        %990 = vmatprep.subr.mxu0 0.0
        %991 = vmatpush1.xpose.msra.mxu0 0.0
        %992 = vmatprep.subr.mxu0 0.0
        %993 = vmatpush1.xpose.msra.mxu0 0.0
        %994 = vmatprep.subr.mxu0 0.0
        %995 = vmatpush1.xpose.msra.mxu0 0.0
        %996 = vmatprep.subr.mxu0 0.0
        %997 = vmatpush1.xpose.msra.mxu0 0.0
        %998 = vmatprep.subr.mxu0 0.0
        %999 = vmatpush1.xpose.msra.mxu0 0.0
        %1000 = vmatprep.subr.mxu0 0.0
        %1001 = vmatpush1.xpose.msra.mxu0 0.0
        %1002 = vmatprep.subr.mxu0 0.0
        %1003 = vmatpush1.xpose.msra.mxu0 0.0
        %1004 = vmatprep.subr.mxu0 0.0
        %1005 = vmatpush1.xpose.msra.mxu0 0.0
        %1006 = vmatprep.subr.mxu0 0.0
        %1007 = vmatpush1.xpose.msra.mxu0 0.0
        %1008 = vmatprep.subr.mxu0 0.0
        %1009 = vmatpush1.xpose.msra.mxu0 0.0
        %1010 = vmatprep.subr.mxu0 0.0
        %1011 = vmatpush1.xpose.msra.mxu0 0.0
        %1012 = vmatprep.subr.mxu0 0.0
        %1013 = vmatpush1.xpose.msra.mxu0 0.0
        %1014 = vmatprep.subr.mxu0 0.0
        %1015 = vmatpush1.xpose.msra.mxu0 0.0
        %1016 = vmatprep.subr.mxu0 0.0
        %1017 = vmatpush1.xpose.msra.mxu0 0.0
        %1018 = vmatprep.subr.mxu0 0.0
        %1019 = vmatpush1.xpose.msra.mxu0 0.0
        %1020 = vmatprep.mubr.f32.mxu0 0.0
        %1021 = vmatmul.mubr.f32.gmra.mrb[0].mxu0 %v921
        %v1022 = vpop.f32.mrb[0].mxu0
        %v1023 = vadd.f32 0.0, %v1022
        %v1024 = vpop.f32.mrb[0].mxu0
        %1025 = vmatprep.mubr.f32.mxu0 0.0
        %1026 = vmatmul.mubr.f32.gmra.mrb[0].mxu0 %v924
        %v1027 = vpop.f32.mrb[0].mxu0
        %v1028 = vadd.f32 0.0, %v1027
        %v1029 = vpop.f32.mrb[0].mxu0
        %1030 = vmatprep.mubr.f32.mxu0 0.0
        %1031 = vmatmul.mubr.f32.gmra.mrb[0].mxu0 %v927
        %v1032 = vpop.f32.mrb[0].mxu0
        %v1033 = vadd.f32 0.0, %v1032
        %v1034 = vpop.f32.mrb[0].mxu0
        %1035 = vmatprep.mubr.f32.mxu0 0.0
        %1036 = vmatmul.mubr.f32.gmra.mrb[0].mxu0 %v930
        %v1037 = vpop.f32.mrb[0].mxu0
        %v1038 = vadd.f32 0.0, %v1037
        %v1039 = vpop.f32.mrb[0].mxu0
        %1040 = vdwg.mxu0
        %v1042 = vsel %vm743, %v408, 0
        %v1045 = vsel %vm743, %v409, 0
        %v1048 = vsel %vm743, %v410, 0
        %v1051 = vsel %vm743, %v411, 0
        %v1054 = vsel %vm743, %v912, 0
        %v1057 = vsel %vm743, %v913, 0
        %v1060 = vsel %vm743, %v914, 0
        %v1063 = vsel %vm743, %v915, 0
        %v1066 = vsel %vm743, %v916, 0
        %v1069 = vsel %vm743, %v917, 0
        %v1072 = vsel %vm743, %v918, 0
        %v1075 = vsel %vm743, %v919, 0
        %1077 = vmatprep.subr.mxu0 0.0
        %1078 = vmatpush1.xpose.msra.mxu0 %v1054
        %1079 = vmatprep.subr.mxu0 0.0
        %1080 = vmatpush1.xpose.msra.mxu0 %v1057
        %1081 = vmatprep.subr.mxu0 0.0
        %1082 = vmatpush1.xpose.msra.mxu0 %v1060
        %1083 = vmatprep.subr.mxu0 0.0
        %1084 = vmatpush1.xpose.msra.mxu0 %v1063
        %1085 = vmatprep.subr.mxu0 0.0
        %1086 = vmatpush1.xpose.msra.mxu0 %v1066
        %1087 = vmatprep.subr.mxu0 0.0
        %1088 = vmatpush1.xpose.msra.mxu0 %v1069
        %1089 = vmatprep.subr.mxu0 0.0
        %1090 = vmatpush1.xpose.msra.mxu0 %v1072
        %1091 = vmatprep.subr.mxu0 0.0
        %1092 = vmatpush1.xpose.msra.mxu0 %v1075
        %1093 = vmatprep.subr.mxu0 0.0
        %1094 = vmatpush1.xpose.msra.mxu0 0.0
        %1095 = vmatprep.subr.mxu0 0.0
        %1096 = vmatpush1.xpose.msra.mxu0 0.0
        %1097 = vmatprep.subr.mxu0 0.0
        %1098 = vmatpush1.xpose.msra.mxu0 0.0
        %1099 = vmatprep.subr.mxu0 0.0
        %1100 = vmatpush1.xpose.msra.mxu0 0.0
        %1101 = vmatprep.subr.mxu0 0.0
        %1102 = vmatpush1.xpose.msra.mxu0 0.0
        %1103 = vmatprep.subr.mxu0 0.0
        %1104 = vmatpush1.xpose.msra.mxu0 0.0
        %1105 = vmatprep.subr.mxu0 0.0
        %1106 = vmatpush1.xpose.msra.mxu0 0.0
        %1107 = vmatprep.subr.mxu0 0.0
        %1108 = vmatpush1.xpose.msra.mxu0 0.0
        %1109 = vmatprep.subr.mxu0 0.0
        %1110 = vmatpush1.xpose.msra.mxu0 0.0
        %1111 = vmatprep.subr.mxu0 0.0
        %1112 = vmatpush1.xpose.msra.mxu0 0.0
        %1113 = vmatprep.subr.mxu0 0.0
        %1114 = vmatpush1.xpose.msra.mxu0 0.0
        %1115 = vmatprep.subr.mxu0 0.0
        %1116 = vmatpush1.xpose.msra.mxu0 0.0
        %1117 = vmatprep.subr.mxu0 0.0
        %1118 = vmatpush1.xpose.msra.mxu0 0.0
        %1119 = vmatprep.subr.mxu0 0.0
        %1120 = vmatpush1.xpose.msra.mxu0 0.0
        %1121 = vmatprep.subr.mxu0 0.0
        %1122 = vmatpush1.xpose.msra.mxu0 0.0
        %1123 = vmatprep.subr.mxu0 0.0
        %1124 = vmatpush1.xpose.msra.mxu0 0.0
        %1125 = vmatprep.subr.mxu0 0.0
        %1126 = vmatpush1.xpose.msra.mxu0 0.0
        %1127 = vmatprep.subr.mxu0 0.0
        %1128 = vmatpush1.xpose.msra.mxu0 0.0
        %1129 = vmatprep.subr.mxu0 0.0
        %1130 = vmatpush1.xpose.msra.mxu0 0.0
        %1131 = vmatprep.subr.mxu0 0.0
        %1132 = vmatpush1.xpose.msra.mxu0 0.0
        %1133 = vmatprep.subr.mxu0 0.0
        %1134 = vmatpush1.xpose.msra.mxu0 0.0
        %1135 = vmatprep.subr.mxu0 0.0
        %1136 = vmatpush1.xpose.msra.mxu0 0.0
        %1137 = vmatprep.subr.mxu0 0.0
        %1138 = vmatpush1.xpose.msra.mxu0 0.0
        %1139 = vmatprep.subr.mxu0 0.0
        %1140 = vmatpush1.xpose.msra.mxu0 0.0
        %1141 = vmatprep.mubr.f32.mxu0 0.0
        %1142 = vmatmul.mubr.f32.gmra.mrb[0].mxu0 %v1042
        %v1143 = vpop.f32.mrb[0].mxu0
        %v1144 = vadd.f32 0.0, %v1143
        %v1145 = vpop.f32.mrb[0].mxu0
        %1146 = vmatprep.mubr.f32.mxu0 0.0
        %1147 = vmatmul.mubr.f32.gmra.mrb[0].mxu0 %v1045
        %v1148 = vpop.f32.mrb[0].mxu0
        %v1149 = vadd.f32 0.0, %v1148
        %v1150 = vpop.f32.mrb[0].mxu0
        %1151 = vmatprep.mubr.f32.mxu0 0.0
        %1152 = vmatmul.mubr.f32.gmra.mrb[0].mxu0 %v1048
        %v1153 = vpop.f32.mrb[0].mxu0
        %v1154 = vadd.f32 0.0, %v1153
        %v1155 = vpop.f32.mrb[0].mxu0
        %1156 = vmatprep.mubr.f32.mxu0 0.0
        %1157 = vmatmul.mubr.f32.gmra.mrb[0].mxu0 %v1051
        %v1158 = vpop.f32.mrb[0].mxu0
        %v1159 = vadd.f32 0.0, %v1158
        %v1160 = vpop.f32.mrb[0].mxu0
        %1161 = vdwg.mxu0
        %1162 = vst.msk [vmem:[%s383] sm:$0xff] %vm743, %v1023
        %1163 = vst.msk [vmem:[%s383 + $0x8] sm:$0xff] %vm743, %v1028
        %1164 = vst.msk [vmem:[%s383 + $0x10] sm:$0xff] %vm743, %v1033
        %1165 = vst.msk [vmem:[%s383 + $0x18] sm:$0xff] %vm743, %v1038
        %1166 = vst.msk [vmem:[%s383 + $0x20] sm:$0xff] %vm743, %v1144
        %1167 = vst.msk [vmem:[%s383 + $0x28] sm:$0xff] %vm743, %v1149
        %1168 = vst.msk [vmem:[%s383 + $0x30] sm:$0xff] %vm743, %v1154
        %1169 = vst.msk [vmem:[%s383 + $0x38] sm:$0xff] %vm743, %v1159
        %s1170 = sand.u32 %s140, 1
        %s1171 = scalar_lea.sflag [#allocation4], %s1170
        %s1172 = sand.u32 %s140, 1
        %s1173 = smul.addr %s1172, 64
        %s1174 = scalar_lea.vmem [#allocation8], %s1173
        // Predicated region
        $region45: #{tpu_custom_call.1} parent=31 // pred_check
          %p1175 = pneg %p150
        $region46: #{tpu_custom_call.1} parent=31 // pred_check_branch
          %1177 = sbr.rel (%p1175) target = $region48
        $region47: #{tpu_custom_call.1} parent=31 // pred_region
          %s1178 = smul.u32 2, %s29
          %s1180 = ssub.s32 1024, 1024
          %1181 = vsyncadd %s1171, %s1180
          %s1182 = smul.addr %s1178, 4
          %s1183 = sadd.s32 %s30, %s1182
          %s1184 = smul.addr %s28, 8
          %s1185 = sadd.s32 %s1183, %s1184
          %s1186 = smul.addr %s1185, 128
          %s1187 = scalar_lea.hbm %s3, %s1186
          %s1188 = sshll.u32 %s1174, 4
          %s1189 = int_to_ptr.vmem [resolvable:$true] %s1188
          %1194 = dma.vmem_to_hbm [thread:$0]  %s1189, 1024, %s1187, %s1171, 128, 128, 8
        $region48: #{tpu_custom_call.1} parent=31 // pred_fallthru
          _
      $region32: #{tpu_custom_call.1} parent=5 // pred_fallthru
        _
      %p1195 = scmp.le.s32.totalorder 2, %s18
      // Predicated region
      $region49: #{tpu_custom_call.1} parent=5 // pred_check
        %p1196 = pneg %p1195
      $region50: #{tpu_custom_call.1} parent=5 // pred_check_branch
        %1198 = sbr.rel (%p1196) target = $region52
      $region51: #{tpu_custom_call.1} parent=5 // pred_region
        %s1199 = ssub.s32 %s18, 2
        // Predicated region
        $region53: #{tpu_custom_call.1} parent=51 // pred_check
          %p1200 = pneg %p156
        $region54: #{tpu_custom_call.1} parent=51 // pred_check_branch
          %1202 = sbr.rel (%p1200) target = $region56
        $region55: #{tpu_custom_call.1} parent=51 // pred_region
          %s1203 = sand.u32 %s141, 1
          %s1204 = scalar_lea.sflag [#allocation4], %s1203
          %s1205 = sand.u32 %s141, 1
          %s1206 = smul.addr %s1205, 64
          %s1207 = scalar_lea.vmem [#allocation8], %s1206
          %1208 = dma.done %s1204, 1024
        $region56: #{tpu_custom_call.1} parent=51 // pred_fallthru
          _
      $region52: #{tpu_custom_call.1} parent=5 // pred_fallthru
        _
    $region6: #{tpu_custom_call.1} parent=1 // loop_footer
      %s22 = sadd.s32 1, %s18
    $region7: #{tpu_custom_call.1} parent=1 // loop_footer_branch
      %17 = sbr.rel target = $region3
    $region8: #{tpu_custom_call.1} parent=1 // loop_exit
      _
    %1209 = vsyncpa [#allocation3], 1
    %s1210 = scalar_lea.sflag [#allocation3], 1
    %1211 = vsyncpa %s1210, 1
    %1212 = vsyncpa [#allocation6], 1
    %s1213 = scalar_lea.sflag [#allocation6], 1
    %1214 = vsyncpa %s1213, 1
    %1215 = vsyncpa [#allocation4], 1
    %s1216 = scalar_lea.sflag [#allocation4], 1
    %1217 = vsyncpa %s1216, 1

// kernel: tpu_custom_call.1
$region0: #{tpu_custom_call.1}
  #allocation0 [shape = 'u32[]', space=smem, size = 0x4, offset = 0x4, fixed_abs, tag = 'smem constant byte address 0x4 - core index']
  #allocation1 [shape = 'u32[144,128]{1,0:T(1,128)}', space=vmem, size = 0x12000, scoped, tag = 'internal scratch']
  #allocation9 [shape = 's32[]', space=sflag, size = 0x4, offset = 0, fixed_abs, tag = 'sflag constant byte address 0x0 - dummy sync flag']
  #allocation11 [shape = 's32[]', space=sflag, size = 0x4, offset = 0, fixed_abs, tag = 'sflag constant byte address 0x0 - dummy sync flag']
  #allocation13 [shape = 's32[]', space=sflag, size = 0x4, offset = 0, fixed_abs, tag = 'sflag constant byte address 0x0 - dummy sync flag']
  %s0 = inlined_call_operand.hbm [shape: f32[2,2,3,32,64], index: 0, kind: input, shape index: {}]
  %s1 = inlined_call_operand.hbm [shape: f32[2,2,3,32,64], index: 1, kind: input, shape index: {}]
  %s2 = inlined_call_operand.hbm [shape: f32[2,2,3,32,64], index: 2, kind: input, shape index: {}]
  %s3 = inlined_call_operand.hbm [shape: f32[2,2,32,64], index: 3, kind: output, shape index: {}]
  %s4 = sld [smem:[#allocation0]]
  $region57: #{tpu_custom_call.1} parent=0
    _
  %s6 = ssub.s32 1, %s4
  %s7 = scalar_select 0, %s6, %s4
  $region1: #{tpu_custom_call.1} parent=0
    #allocation2 [shape = 'u8[65536]{0}', space=vmem, size = 0x10000, scoped, tag = 'input window, operand 0']
    #allocation3 [shape = 's32[2]{0}', space=sflag, size = 0x8, scoped, tag = 'scoped memory for tpu_custom_call.1']
    #allocation4 [shape = 's32[2]{0}', space=sflag, size = 0x8, scoped, tag = 'scoped memory for tpu_custom_call.1']
    #allocation5 [shape = 'u8[65536]{0}', space=vmem, size = 0x10000, scoped, tag = 'input window, operand 1']
    #allocation6 [shape = 's32[2]{0}', space=sflag, size = 0x8, scoped, tag = 'scoped memory for tpu_custom_call.1']
    #allocation7 [shape = 'u8[65536]{0}', space=vmem, size = 0x10000, scoped, tag = 'input window, operand 2']
    #allocation8 [shape = 'u8[65536]{0}', space=vmem, size = 0x10000, scoped, tag = 'output window, operand 0']
    %8 = vsyncpa [#allocation3], 0
    %s9 = scalar_lea.sflag [#allocation3], 1
    %10 = vsyncpa %s9, 0
    %11 = vsyncpa [#allocation6], 0
    %s12 = scalar_lea.sflag [#allocation6], 1
    %13 = vsyncpa %s12, 0
    %14 = vsyncpa [#allocation4], 0
    %s15 = scalar_lea.sflag [#allocation4], 1
    %16 = vsyncpa %s15, 0
    loop: start=0, step=1, limit=4
    $region2: #{tpu_custom_call.1} parent=1 // loop_pre_header
      _
    $region3: #{tpu_custom_call.1} parent=1 // loop_header
      %s18 = sphi 0, %s22
      %p19 = scmp.ge.s32.totalorder %s18, 4
      %s25 = sphi 0, %s44
      %s26 = sphi 0, %s40
      %s27 = sphi 0, %s36
      %s28 = sphi 0, %s25
      %s29 = sphi 0, %s26
      %s30 = sphi 0, %s27
      %s31 = sphi 0, %s28
      %s32 = sphi 0, %s29
      %s33 = sphi 0, %s30
      %s51 = sphi 0, %s53
      %s54 = sphi 0, %s51
      %s55 = sphi 0, %s54
      %s71 = sphi 0, %s55
      %s79 = sphi 0, %s81
      %s82 = sphi 0, %s79
      %s83 = sphi 0, %s82
      %s99 = sphi 0, %s83
      %s107 = sphi 0, %s109
      %s110 = sphi 0, %s107
      %s111 = sphi 0, %s110
      %s127 = sphi 0, %s111
      %s137 = sphi 0, %s139
      %s140 = sphi 0, %s137
      %s141 = sphi 0, %s140
      %s157 = sphi 0, %s141
    $region4: #{tpu_custom_call.1} parent=1 // loop_header_branch
      %21 = sbr.rel (%p19) target = $region8
    $region5: #{tpu_custom_call.1} parent=1 // loop_body
      %s23 = ssub.s32 %s18, 1
      %s24 = ssub.s32 %s18, 2
      %s34 = sadd.s32 1, %s27
      %p35 = scmp.ge.s32.totalorder %s34, 1
      %s36 = scalar_select %p35, 0, %s34
      %s37 = sadd.s32 1, %s26
      %s38 = scalar_select %p35, %s37, %s26
      %p39 = scmp.ge.s32.totalorder %s38, 1
      %s40 = scalar_select %p39, 0, %s38
      %s41 = sadd.s32 1, %s25
      %s42 = scalar_select %p39, %s41, %s25
      %p43 = scmp.ge.s32.totalorder %s42, 2
      %s44 = scalar_select %p43, 0, %s42
      %s45 = ssub.s32 %s25, %s44
      %s46 = ssub.s32 %s26, %s40
      %s47 = sor.u32 %s45, %s46
      %s48 = ssub.s32 %s27, %s36
      %s49 = sor.u32 %s47, %s48
      %p50 = scmp.eq.s32.totalorder %s49, 0
      %s52 = sadd.s32 %s51, 1
      %s53 = scalar_select %p50, %s51, %s52
      %p56 = pneg %p50
      %p57 = scmp.eq.s32.totalorder %s18, 1
      %p58 = por %p56, %p57
      %p59 = scmp.ne.s32.totalorder %s51, %s54
      %p60 = scmp.eq.s32.totalorder %s18, 0
      %p61 = por %p59, %p60
      %p62 = scmp.ne.s32.totalorder %s51, %s54
      %p63 = scmp.eq.s32.totalorder %s23, 1
      %p64 = por %p62, %p63
      %p65 = scmp.ne.s32.totalorder %s54, %s55
      %p66 = scmp.eq.s32.totalorder %s23, 0
      %p67 = por %p65, %p66
      %p68 = scmp.ne.s32.totalorder %s54, %s55
      %p69 = scmp.eq.s32.totalorder %s24, 1
      %p70 = por %p68, %p69
      %p72 = scmp.ne.s32.totalorder %s55, %s71
      %p73 = scmp.eq.s32.totalorder %s24, 0
      %p74 = por %p72, %p73
      %s75 = ssub.s32 %s25, %s44
      %s76 = ssub.s32 %s26, %s40
      %s77 = sor.u32 %s75, %s76
      %p78 = scmp.eq.s32.totalorder %s77, 0
      %s80 = sadd.s32 %s79, 1
      %s81 = scalar_select %p78, %s79, %s80
      %p84 = pneg %p78
      %p85 = scmp.eq.s32.totalorder %s18, 1
      %p86 = por %p84, %p85
      %p87 = scmp.ne.s32.totalorder %s79, %s82
      %p88 = scmp.eq.s32.totalorder %s18, 0
      %p89 = por %p87, %p88
      %p90 = scmp.ne.s32.totalorder %s79, %s82
      %p91 = scmp.eq.s32.totalorder %s23, 1
      %p92 = por %p90, %p91
      %p93 = scmp.ne.s32.totalorder %s82, %s83
      %p94 = scmp.eq.s32.totalorder %s23, 0
      %p95 = por %p93, %p94
      %p96 = scmp.ne.s32.totalorder %s82, %s83
      %p97 = scmp.eq.s32.totalorder %s24, 1
      %p98 = por %p96, %p97
      %p100 = scmp.ne.s32.totalorder %s83, %s99
      %p101 = scmp.eq.s32.totalorder %s24, 0
      %p102 = por %p100, %p101
      %s103 = ssub.s32 %s25, %s44
      %s104 = ssub.s32 %s26, %s40
      %s105 = sor.u32 %s103, %s104
      %p106 = scmp.eq.s32.totalorder %s105, 0
      %s108 = sadd.s32 %s107, 1
      %s109 = scalar_select %p106, %s107, %s108
      %p112 = pneg %p106
      %p113 = scmp.eq.s32.totalorder %s18, 1
      %p114 = por %p112, %p113
      %p115 = scmp.ne.s32.totalorder %s107, %s110
      %p116 = scmp.eq.s32.totalorder %s18, 0
      %p117 = por %p115, %p116
      %p118 = scmp.ne.s32.totalorder %s107, %s110
      %p119 = scmp.eq.s32.totalorder %s23, 1
      %p120 = por %p118, %p119
      %p121 = scmp.ne.s32.totalorder %s110, %s111
      %p122 = scmp.eq.s32.totalorder %s23, 0
      %p123 = por %p121, %p122
      %p124 = scmp.ne.s32.totalorder %s110, %s111
      %p125 = scmp.eq.s32.totalorder %s24, 1
      %p126 = por %p124, %p125
      %p128 = scmp.ne.s32.totalorder %s111, %s127
      %p129 = scmp.eq.s32.totalorder %s24, 0
      %p130 = por %p128, %p129
      %s131 = ssub.s32 %s25, %s44
      %s132 = ssub.s32 %s26, %s40
      %s133 = sor.u32 %s131, %s132
      %s134 = ssub.s32 %s27, %s36
      %s135 = sor.u32 %s133, %s134
      %p136 = scmp.eq.s32.totalorder %s135, 0
      %s138 = sadd.s32 %s137, 1
      %s139 = scalar_select %p136, %s137, %s138
      %p142 = pneg %p136
      %p143 = scmp.eq.s32.totalorder %s18, 1
      %p144 = por %p142, %p143
      %p145 = scmp.ne.s32.totalorder %s137, %s140
      %p146 = scmp.eq.s32.totalorder %s18, 0
      %p147 = por %p145, %p146
      %p148 = scmp.ne.s32.totalorder %s137, %s140
      %p149 = scmp.eq.s32.totalorder %s23, 1
      %p150 = por %p148, %p149
      %p151 = scmp.ne.s32.totalorder %s140, %s141
      %p152 = scmp.eq.s32.totalorder %s23, 0
      %p153 = por %p151, %p152
      %p154 = scmp.ne.s32.totalorder %s140, %s141
      %p155 = scmp.eq.s32.totalorder %s24, 1
      %p156 = por %p154, %p155
      %p158 = scmp.ne.s32.totalorder %s141, %s157
      %p159 = scmp.eq.s32.totalorder %s24, 0
      %p160 = por %p158, %p159
      %p161 = scmp.le.s32.totalorder 1, %s18
      %p162 = scmp.lt.s32.totalorder %s18, 3
      %p163 = pnand %p161, %p162
      %p164 = pneg %p163
      // Predicated region
      $region9: #{tpu_custom_call.1} parent=5 // pred_check
        _
      $region10: #{tpu_custom_call.1} parent=5 // pred_check_branch
        %166 = sbr.rel (%p163) target = $region12
      $region11: #{tpu_custom_call.1} parent=5 // pred_region
        %s167 = ssub.s32 %s18, 1
      $region12: #{tpu_custom_call.1} parent=5 // pred_fallthru
        _
      %p168 = scmp.lt.s32.totalorder %s18, 2
      // Predicated region
      $region13: #{tpu_custom_call.1} parent=5 // pred_check
        %p169 = pneg %p168
      $region14: #{tpu_custom_call.1} parent=5 // pred_check_branch
        %171 = sbr.rel (%p169) target = $region16
      $region15: #{tpu_custom_call.1} parent=5 // pred_region
        // Predicated region
        $region17: #{tpu_custom_call.1} parent=15 // pred_check
          %p172 = pneg %p61
        $region18: #{tpu_custom_call.1} parent=15 // pred_check_branch
          %174 = sbr.rel (%p172) target = $region20
        $region19: #{tpu_custom_call.1} parent=15 // pred_region
          #allocation10 [shape = 'u32[6]{0}', space=smem, size = 0x18, scoped, tag = 'DMA stride descriptor']
          %s175 = sand.u32 %s51, 1
          %s176 = scalar_lea.sflag [#allocation3], %s175
          %s177 = sand.u32 %s51, 1
          %s178 = smul.addr %s177, 64
          %s179 = scalar_lea.vmem [#allocation2], %s178
          %s180 = smul.u32 2, %s26
          %s182 = ssub.s32 1024, 1024
          %183 = vsyncadd %s176, %s182
          %s184 = smul.addr %s180, 12
          %s185 = sadd.s32 %s27, %s184
          %s186 = smul.addr %s25, 24
          %s187 = sadd.s32 %s185, %s186
          %s188 = smul.addr %s187, 128
          %s189 = scalar_lea.hbm %s0, %s188
          %s191 = sshll.u32 1, 14
          %s192 = sxor.u32 4294967295, %s191
          %s194 = sld [smem:[#allocation0]]
          %s195 = sadd.s32 2, %s194
          %s197 = sshll.u32 7, 26
          %s198 = sxor.u32 4294967295, %s197
          %s199 = sand.u32 0, %s198
          %s200 = sshll.u32 %s195, 26
          %s201 = sor.u32 %s199, %s200
          %s202 = sshll.u32 %s179, 4
          %s203 = int_to_ptr.vmem [resolvable:$true] %s202
          %209 = sst [smem:[#allocation10]] 1536
          %s210 = scalar_lea.smem [#allocation10], 1
          %211 = sst [smem:[%s210]] 512
          %s212 = scalar_lea.smem [#allocation10], 2
          %213 = sst [smem:[%s212]] 4
          %s214 = scalar_lea.smem [#allocation10], 3
          %215 = sst [smem:[%s214]] 128
          %s216 = scalar_lea.smem [#allocation10], 4
          %217 = sst [smem:[%s216]] 128
          %s218 = scalar_lea.smem [#allocation10], 5
          %219 = sst [smem:[%s218]] 8
          %221 = dma.general %s189, 1024, %s203, %s176, [#allocation9], [#allocation10], %s201, 0
        $region20: #{tpu_custom_call.1} parent=15 // pred_fallthru
          _
        // Predicated region
        $region21: #{tpu_custom_call.1} parent=15 // pred_check
          %p222 = pneg %p89
        $region22: #{tpu_custom_call.1} parent=15 // pred_check_branch
          %224 = sbr.rel (%p222) target = $region24
        $region23: #{tpu_custom_call.1} parent=15 // pred_region
          #allocation12 [shape = 'u32[6]{0}', space=smem, size = 0x18, scoped, tag = 'DMA stride descriptor']
          %s225 = sand.u32 %s18, 1
          %s226 = scalar_lea.sflag [#allocation6], %s225
          %s227 = sand.u32 %s79, 1
          %s228 = smul.addr %s227, 64
          %s229 = scalar_lea.vmem [#allocation5], %s228
          %s230 = smul.u32 2, %s26
          %s232 = ssub.s32 1024, 1024
          %233 = vsyncadd %s226, %s232
          %s234 = smul.addr %s230, 12
          %s235 = sadd.s32 4, %s234
          %s236 = smul.addr %s25, 24
          %s237 = sadd.s32 %s235, %s236
          %s238 = smul.addr %s237, 128
          %s239 = scalar_lea.hbm %s1, %s238
          %s241 = sshll.u32 1, 14
          %s242 = sxor.u32 4294967295, %s241
          %s244 = sld [smem:[#allocation0]]
          %s245 = sadd.s32 2, %s244
          %s247 = sshll.u32 7, 26
          %s248 = sxor.u32 4294967295, %s247
          %s249 = sand.u32 0, %s248
          %s250 = sshll.u32 %s245, 26
          %s251 = sor.u32 %s249, %s250
          %s252 = sshll.u32 %s229, 4
          %s253 = int_to_ptr.vmem [resolvable:$true] %s252
          %259 = sst [smem:[#allocation12]] 1536
          %s260 = scalar_lea.smem [#allocation12], 1
          %261 = sst [smem:[%s260]] 512
          %s262 = scalar_lea.smem [#allocation12], 2
          %263 = sst [smem:[%s262]] 4
          %s264 = scalar_lea.smem [#allocation12], 3
          %265 = sst [smem:[%s264]] 128
          %s266 = scalar_lea.smem [#allocation12], 4
          %267 = sst [smem:[%s266]] 128
          %s268 = scalar_lea.smem [#allocation12], 5
          %269 = sst [smem:[%s268]] 8
          %271 = dma.general %s239, 1024, %s253, %s226, [#allocation11], [#allocation12], %s251, 0
        $region24: #{tpu_custom_call.1} parent=15 // pred_fallthru
          _
        // Predicated region
        $region25: #{tpu_custom_call.1} parent=15 // pred_check
          %p272 = pneg %p117
        $region26: #{tpu_custom_call.1} parent=15 // pred_check_branch
          %274 = sbr.rel (%p272) target = $region28
        $region27: #{tpu_custom_call.1} parent=15 // pred_region
          #allocation14 [shape = 'u32[6]{0}', space=smem, size = 0x18, scoped, tag = 'DMA stride descriptor']
          %s275 = sand.u32 %s18, 1
          %s276 = scalar_lea.sflag [#allocation6], %s275
          %s277 = sand.u32 %s107, 1
          %s278 = smul.addr %s277, 64
          %s279 = scalar_lea.vmem [#allocation7], %s278
          %s280 = smul.u32 2, %s26
          %s282 = ssub.s32 1024, 1024
          %283 = vsyncadd %s276, %s282
          %s284 = smul.addr %s280, 12
          %s285 = sadd.s32 8, %s284
          %s286 = smul.addr %s25, 24
          %s287 = sadd.s32 %s285, %s286
          %s288 = smul.addr %s287, 128
          %s289 = scalar_lea.hbm %s2, %s288
          %s291 = sshll.u32 1, 14
          %s292 = sxor.u32 4294967295, %s291
          %s294 = sld [smem:[#allocation0]]
          %s295 = sadd.s32 2, %s294
          %s297 = sshll.u32 7, 26
          %s298 = sxor.u32 4294967295, %s297
          %s299 = sand.u32 0, %s298
          %s300 = sshll.u32 %s295, 26
          %s301 = sor.u32 %s299, %s300
          %s302 = sshll.u32 %s279, 4
          %s303 = int_to_ptr.vmem [resolvable:$true] %s302
          %309 = sst [smem:[#allocation14]] 1536
          %s310 = scalar_lea.smem [#allocation14], 1
          %311 = sst [smem:[%s310]] 512
          %s312 = scalar_lea.smem [#allocation14], 2
          %313 = sst [smem:[%s312]] 4
          %s314 = scalar_lea.smem [#allocation14], 3
          %315 = sst [smem:[%s314]] 128
          %s316 = scalar_lea.smem [#allocation14], 4
          %317 = sst [smem:[%s316]] 128
          %s318 = scalar_lea.smem [#allocation14], 5
          %319 = sst [smem:[%s318]] 8
          %321 = dma.general %s289, 1024, %s303, %s276, [#allocation13], [#allocation14], %s301, 0
        $region28: #{tpu_custom_call.1} parent=15 // pred_fallthru
          _
      $region16: #{tpu_custom_call.1} parent=5 // pred_fallthru
        _
      %p322 = scmp.le.s32.totalorder 1, %s18
      %p323 = scmp.lt.s32.totalorder %s18, 3
      %p324 = pnand %p322, %p323
      %p325 = pneg %p324
      // Predicated region
      $region29: #{tpu_custom_call.1} parent=5 // pred_check
        _
      $region30: #{tpu_custom_call.1} parent=5 // pred_check_branch
        %327 = sbr.rel (%p324) target = $region32
      $region31: #{tpu_custom_call.1} parent=5 // pred_region
        %s328 = ssub.s32 %s18, 1
        %s329 = sand.u32 %s54, 1
        %s330 = scalar_lea.sflag [#allocation3], %s329
        %s331 = sand.u32 %s54, 1
        %s332 = smul.addr %s331, 64
        %s333 = scalar_lea.vmem [#allocation2], %s332
        // Predicated region
        $region33: #{tpu_custom_call.1} parent=31 // pred_check
          %p334 = pneg %p67
        $region34: #{tpu_custom_call.1} parent=31 // pred_check_branch
          %336 = sbr.rel (%p334) target = $region36
        $region35: #{tpu_custom_call.1} parent=31 // pred_region
          %337 = dma.done %s330, 1024
        $region36: #{tpu_custom_call.1} parent=31 // pred_fallthru
          _
        %s338 = sand.u32 %s23, 1
        %s339 = scalar_lea.sflag [#allocation6], %s338
        %s340 = sand.u32 %s82, 1
        %s341 = smul.addr %s340, 64
        %s342 = scalar_lea.vmem [#allocation5], %s341
        // Predicated region
        $region37: #{tpu_custom_call.1} parent=31 // pred_check
          %p343 = pneg %p95
        $region38: #{tpu_custom_call.1} parent=31 // pred_check_branch
          %345 = sbr.rel (%p343) target = $region40
        $region39: #{tpu_custom_call.1} parent=31 // pred_region
          %346 = dma.done %s339, 1024
        $region40: #{tpu_custom_call.1} parent=31 // pred_fallthru
          _
        %s347 = sand.u32 %s23, 1
        %s348 = scalar_lea.sflag [#allocation6], %s347
        %s349 = sand.u32 %s110, 1
        %s350 = smul.addr %s349, 64
        %s351 = scalar_lea.vmem [#allocation7], %s350
        // Predicated region
        $region41: #{tpu_custom_call.1} parent=31 // pred_check
          %p352 = pneg %p123
        $region42: #{tpu_custom_call.1} parent=31 // pred_check_branch
          %354 = sbr.rel (%p352) target = $region44
        $region43: #{tpu_custom_call.1} parent=31 // pred_region
          %355 = dma.done %s348, 1024
        $region44: #{tpu_custom_call.1} parent=31 // pred_fallthru
          _
        %s356 = sand.u32 %s54, 1
        %s357 = scalar_lea.sflag [#allocation3], %s356
        %s358 = sand.u32 %s54, 1
        %s359 = smul.addr %s358, 64
        %s360 = scalar_lea.vmem [#allocation2], %s359
        %p361 = pneg %p67
        %p362 = pneg %p64
        %s363 = sand.u32 %s23, 1
        %s364 = scalar_lea.sflag [#allocation6], %s363
        %s365 = sand.u32 %s82, 1
        %s366 = smul.addr %s365, 64
        %s367 = scalar_lea.vmem [#allocation5], %s366
        %p368 = pneg %p95
        %p369 = pneg %p92
        %s370 = sand.u32 %s23, 1
        %s371 = scalar_lea.sflag [#allocation6], %s370
        %s372 = sand.u32 %s110, 1
        %s373 = smul.addr %s372, 64
        %s374 = scalar_lea.vmem [#allocation7], %s373
        %p375 = pneg %p123
        %p376 = pneg %p120
        %p377 = pneg %p153
        %p378 = pneg %p150
        %s379 = sand.u32 %s140, 1
        %s380 = scalar_lea.sflag [#allocation4], %s379
        %s381 = sand.u32 %s140, 1
        %s382 = smul.addr %s381, 64
        %s383 = scalar_lea.vmem [#allocation8], %s382
        %s384 = smul.u32 2, %s29
        %s385 = smul.u32 2, %s29
        %s386 = smul.u32 2, %s29
        %s387 = smul.u32 2, %s29
        %v388 = vld [vmem:[%s333] sm:$0xff]
        %v389 = vld [vmem:[%s333 + $0x8] sm:$0xff]
        %v390 = vld [vmem:[%s333 + $0x10] sm:$0xff]
        %v391 = vld [vmem:[%s333 + $0x18] sm:$0xff]
        %v392 = vld [vmem:[%s333 + $0x20] sm:$0xff]
        %v393 = vld [vmem:[%s333 + $0x28] sm:$0xff]
        %v394 = vld [vmem:[%s333 + $0x30] sm:$0xff]
        %v395 = vld [vmem:[%s333 + $0x38] sm:$0xff]
        %v396 = vld [vmem:[%s342] sm:$0xff]
        %v397 = vld [vmem:[%s342 + $0x8] sm:$0xff]
        %v398 = vld [vmem:[%s342 + $0x10] sm:$0xff]
        %v399 = vld [vmem:[%s342 + $0x18] sm:$0xff]
        %v400 = vld [vmem:[%s342 + $0x20] sm:$0xff]
        %v401 = vld [vmem:[%s342 + $0x28] sm:$0xff]
        %v402 = vld [vmem:[%s342 + $0x30] sm:$0xff]
        %v403 = vld [vmem:[%s342 + $0x38] sm:$0xff]
        %v404 = vld [vmem:[%s351] sm:$0xff]
        %v405 = vld [vmem:[%s351 + $0x8] sm:$0xff]
        %v406 = vld [vmem:[%s351 + $0x10] sm:$0xff]
        %v407 = vld [vmem:[%s351 + $0x18] sm:$0xff]
        %v408 = vld [vmem:[%s351 + $0x20] sm:$0xff]
        %v409 = vld [vmem:[%s351 + $0x28] sm:$0xff]
        %v410 = vld [vmem:[%s351 + $0x30] sm:$0xff]
        %v411 = vld [vmem:[%s351 + $0x38] sm:$0xff]
        %v412 = vmul.f32 %v388, 0.17677669
        %v413 = vmul.f32 %v389, 0.17677669
        %v414 = vmul.f32 %v390, 0.17677669
        %v415 = vmul.f32 %v391, 0.17677669
        %v416 = vmul.f32 %v392, 0.17677669
        %v417 = vmul.f32 %v393, 0.17677669
        %v418 = vmul.f32 %v394, 0.17677669
        %v419 = vmul.f32 %v395, 0.17677669
        %420 = vxpose.xlu0.b32.start [1/16] %v412, 128
        %421 = vxpose.xlu0.b32.cont [2/16] %v413, 128
        %422 = vxpose.xlu0.b32.cont [3/16] %v414, 128
        %423 = vxpose.xlu0.b32.cont [4/16] %v415, 128
        %424 = vxpose.xlu0.b32.cont [5/16] 0.0, 128
        %425 = vxpose.xlu0.b32.cont [6/16] 0.0, 128
        %426 = vxpose.xlu0.b32.cont [7/16] 0.0, 128
        %427 = vxpose.xlu0.b32.cont [8/16] 0.0, 128
        %428 = vxpose.xlu0.b32.cont [9/16] 0.0, 128
        %429 = vxpose.xlu0.b32.cont [10/16] 0.0, 128
        %430 = vxpose.xlu0.b32.cont [11/16] 0.0, 128
        %431 = vxpose.xlu0.b32.cont [12/16] 0.0, 128
        %432 = vxpose.xlu0.b32.cont [13/16] 0.0, 128
        %433 = vxpose.xlu0.b32.cont [14/16] 0.0, 128
        %434 = vxpose.xlu0.b32.cont [15/16] 0.0, 128
        %435 = vxpose.xlu0.b32.end [16/16] 0.0, 128
        %v436 = vpop.trf.xlu0
        %v437 = vpop.trf.xlu0
        %v438 = vpop.trf.xlu0
        %v439 = vpop.trf.xlu0
        %v440 = vpop.trf.xlu0
        %v441 = vpop.trf.xlu0
        %v442 = vpop.trf.xlu0
        %v443 = vpop.trf.xlu0
        %v444 = vpop.trf.xlu0
        %v445 = vpop.trf.xlu0
        %v446 = vpop.trf.xlu0
        %v447 = vpop.trf.xlu0
        %v448 = vpop.trf.xlu0
        %v449 = vpop.trf.xlu0
        %v450 = vpop.trf.xlu0
        %v451 = vpop.trf.xlu0
        %vm452 = vcmask 261120
        %v454 = vsel %vm452, %v436, 0
        %v457 = vsel %vm452, %v437, 0
        %v460 = vsel %vm452, %v438, 0
        %v463 = vsel %vm452, %v439, 0
        %v466 = vsel %vm452, %v440, 0
        %v469 = vsel %vm452, %v441, 0
        %v472 = vsel %vm452, %v442, 0
        %v475 = vsel %vm452, %v443, 0
        %477 = vmatprep.subr.mxu0 0.0
        %478 = vmatpush1.msra.mxu0 %v396
        %479 = vmatprep.subr.mxu0 0.0
        %480 = vmatpush1.msra.mxu0 %v397
        %481 = vmatprep.subr.mxu0 0.0
        %482 = vmatpush1.msra.mxu0 %v398
        %483 = vmatprep.subr.mxu0 0.0
        %484 = vmatpush1.msra.mxu0 %v399
        %485 = vmatprep.subr.mxu0 0.0
        %486 = vmatpush1.msra.mxu0 0.0
        %487 = vmatprep.subr.mxu0 0.0
        %488 = vmatpush1.msra.mxu0 0.0
        %489 = vmatprep.subr.mxu0 0.0
        %490 = vmatpush1.msra.mxu0 0.0
        %491 = vmatprep.subr.mxu0 0.0
        %492 = vmatpush1.msra.mxu0 0.0
        %493 = vmatprep.subr.mxu0 0.0
        %494 = vmatpush1.msra.mxu0 0.0
        %495 = vmatprep.subr.mxu0 0.0
        %496 = vmatpush1.msra.mxu0 0.0
        %497 = vmatprep.subr.mxu0 0.0
        %498 = vmatpush1.msra.mxu0 0.0
        %499 = vmatprep.subr.mxu0 0.0
        %500 = vmatpush1.msra.mxu0 0.0
        %501 = vmatprep.subr.mxu0 0.0
        %502 = vmatpush1.msra.mxu0 0.0
        %503 = vmatprep.subr.mxu0 0.0
        %504 = vmatpush1.msra.mxu0 0.0
        %505 = vmatprep.subr.mxu0 0.0
        %506 = vmatpush1.msra.mxu0 0.0
        %507 = vmatprep.subr.mxu0 0.0
        %508 = vmatpush1.msra.mxu0 0.0
        %509 = vmatprep.subr.mxu0 0.0
        %510 = vmatpush1.msra.mxu0 0.0
        %511 = vmatprep.subr.mxu0 0.0
        %512 = vmatpush1.msra.mxu0 0.0
        %513 = vmatprep.subr.mxu0 0.0
        %514 = vmatpush1.msra.mxu0 0.0
        %515 = vmatprep.subr.mxu0 0.0
        %516 = vmatpush1.msra.mxu0 0.0
        %517 = vmatprep.subr.mxu0 0.0
        %518 = vmatpush1.msra.mxu0 0.0
        %519 = vmatprep.subr.mxu0 0.0
        %520 = vmatpush1.msra.mxu0 0.0
        %521 = vmatprep.subr.mxu0 0.0
        %522 = vmatpush1.msra.mxu0 0.0
        %523 = vmatprep.subr.mxu0 0.0
        %524 = vmatpush1.msra.mxu0 0.0
        %525 = vmatprep.subr.mxu0 0.0
        %526 = vmatpush1.msra.mxu0 0.0
        %527 = vmatprep.subr.mxu0 0.0
        %528 = vmatpush1.msra.mxu0 0.0
        %529 = vmatprep.subr.mxu0 0.0
        %530 = vmatpush1.msra.mxu0 0.0
        %531 = vmatprep.subr.mxu0 0.0
        %532 = vmatpush1.msra.mxu0 0.0
        %533 = vmatprep.subr.mxu0 0.0
        %534 = vmatpush1.msra.mxu0 0.0
        %535 = vmatprep.subr.mxu0 0.0
        %536 = vmatpush1.msra.mxu0 0.0
        %537 = vmatprep.subr.mxu0 0.0
        %538 = vmatpush1.msra.mxu0 0.0
        %539 = vmatprep.subr.mxu0 0.0
        %540 = vmatpush1.msra.mxu0 0.0
        %541 = vmatprep.mubr.f32.mxu0 0.0
        %542 = vmatmul.mubr.f32.gmra.mrb[0].mxu0 %v454
        %v543 = vpop.f32.mrb[0].mxu0
        %v544 = vadd.f32 0.0, %v543
        %v545 = vpop.f32.mrb[0].mxu0
        %546 = vmatprep.mubr.f32.mxu0 0.0
        %547 = vmatmul.mubr.f32.gmra.mrb[0].mxu0 %v457
        %v548 = vpop.f32.mrb[0].mxu0
        %v549 = vadd.f32 0.0, %v548
        %v550 = vpop.f32.mrb[0].mxu0
        %551 = vmatprep.mubr.f32.mxu0 0.0
        %552 = vmatmul.mubr.f32.gmra.mrb[0].mxu0 %v460
        %v553 = vpop.f32.mrb[0].mxu0
        %v554 = vadd.f32 0.0, %v553
        %v555 = vpop.f32.mrb[0].mxu0
        %556 = vmatprep.mubr.f32.mxu0 0.0
        %557 = vmatmul.mubr.f32.gmra.mrb[0].mxu0 %v463
        %v558 = vpop.f32.mrb[0].mxu0
        %v559 = vadd.f32 0.0, %v558
        %v560 = vpop.f32.mrb[0].mxu0
        %561 = vmatprep.mubr.f32.mxu0 0.0
        %562 = vmatmul.mubr.f32.gmra.mrb[0].mxu0 %v466
        %v563 = vpop.f32.mrb[0].mxu0
        %v564 = vadd.f32 0.0, %v563
        %v565 = vpop.f32.mrb[0].mxu0
        %566 = vmatprep.mubr.f32.mxu0 0.0
        %567 = vmatmul.mubr.f32.gmra.mrb[0].mxu0 %v469
        %v568 = vpop.f32.mrb[0].mxu0
        %v569 = vadd.f32 0.0, %v568
        %v570 = vpop.f32.mrb[0].mxu0
        %571 = vmatprep.mubr.f32.mxu0 0.0
        %572 = vmatmul.mubr.f32.gmra.mrb[0].mxu0 %v472
        %v573 = vpop.f32.mrb[0].mxu0
        %v574 = vadd.f32 0.0, %v573
        %v575 = vpop.f32.mrb[0].mxu0
        %576 = vmatprep.mubr.f32.mxu0 0.0
        %577 = vmatmul.mubr.f32.gmra.mrb[0].mxu0 %v475
        %v578 = vpop.f32.mrb[0].mxu0
        %v579 = vadd.f32 0.0, %v578
        %v580 = vpop.f32.mrb[0].mxu0
        %581 = vdwg.mxu0
        %vm582 = vcmask 523264
        %v583 = vsel %vm582, %v544, -inf
        %584 = vmax.xlane.f32.xlu0 %v583
        %v585 = vpop.xlane.xlu0 %584
        %v586 = vsel %vm582, %v549, -inf
        %587 = vmax.xlane.f32.xlu0 %v586
        %v588 = vpop.xlane.xlu0 %587
        %v589 = vsel %vm582, %v554, -inf
        %590 = vmax.xlane.f32.xlu0 %v589
        %v591 = vpop.xlane.xlu0 %590
        %v592 = vsel %vm582, %v559, -inf
        %593 = vmax.xlane.f32.xlu0 %v592
        %v594 = vpop.xlane.xlu0 %593
        %v595 = vsel %vm582, %v564, -inf
        %596 = vmax.xlane.f32.xlu0 %v595
        %v597 = vpop.xlane.xlu0 %596
        %v598 = vsel %vm582, %v569, -inf
        %599 = vmax.xlane.f32.xlu0 %v598
        %v600 = vpop.xlane.xlu0 %599
        %v601 = vsel %vm582, %v574, -inf
        %602 = vmax.xlane.f32.xlu0 %v601
        %v603 = vpop.xlane.xlu0 %602
        %v604 = vsel %vm582, %v579, -inf
        %605 = vmax.xlane.f32.xlu0 %v604
        %v606 = vpop.xlane.xlu0 %605
        %v607 = vsub.f32 %v544, %v585
        %v608 = vsub.f32 %v549, %v588
        %v609 = vsub.f32 %v554, %v591
        %v610 = vsub.f32 %v559, %v594
        %v611 = vsub.f32 %v564, %v597
        %v612 = vsub.f32 %v569, %v600
        %v613 = vsub.f32 %v574, %v603
        %v614 = vsub.f32 %v579, %v606
        %v615 = vmul.f32 %v607, 1.442695
        %v616 = vpow.pop %v615
        %v617 = vmul.f32 %v608, 1.442695
        %v618 = vpow.pop %v617
        %v619 = vmul.f32 %v609, 1.442695
        %v620 = vpow.pop %v619
        %v621 = vmul.f32 %v610, 1.442695
        %v622 = vpow.pop %v621
        %v623 = vmul.f32 %v611, 1.442695
        %v624 = vpow.pop %v623
        %v625 = vmul.f32 %v612, 1.442695
        %v626 = vpow.pop %v625
        %v627 = vmul.f32 %v613, 1.442695
        %v628 = vpow.pop %v627
        %v629 = vmul.f32 %v614, 1.442695
        %v630 = vpow.pop %v629
        %v631 = vsel %vm582, %v616, 0.0
        %632 = vadd.xlane.f32.xlu0 %v631
        %v633 = vpop.xlane.xlu0 %632
        %v634 = vsel %vm582, %v618, 0.0
        %635 = vadd.xlane.f32.xlu0 %v634
        %v636 = vpop.xlane.xlu0 %635
        %v637 = vsel %vm582, %v620, 0.0
        %638 = vadd.xlane.f32.xlu0 %v637
        %v639 = vpop.xlane.xlu0 %638
        %v640 = vsel %vm582, %v622, 0.0
        %641 = vadd.xlane.f32.xlu0 %v640
        %v642 = vpop.xlane.xlu0 %641
        %v643 = vsel %vm582, %v624, 0.0
        %644 = vadd.xlane.f32.xlu0 %v643
        %v645 = vpop.xlane.xlu0 %644
        %v646 = vsel %vm582, %v626, 0.0
        %647 = vadd.xlane.f32.xlu0 %v646
        %v648 = vpop.xlane.xlu0 %647
        %v649 = vsel %vm582, %v628, 0.0
        %650 = vadd.xlane.f32.xlu0 %v649
        %v651 = vpop.xlane.xlu0 %650
        %v652 = vsel %vm582, %v630, 0.0
        %653 = vadd.xlane.f32.xlu0 %v652
        %v654 = vpop.xlane.xlu0 %653
        %v655 = vrcp.pop %v633
        %v656 = vrcp.pop %v636
        %v657 = vrcp.pop %v639
        %v658 = vrcp.pop %v642
        %v659 = vrcp.pop %v645
        %v660 = vrcp.pop %v648
        %v661 = vrcp.pop %v651
        %v662 = vrcp.pop %v654
        %v663 = vmul.f32 %v616, %v655
        %v664 = vmul.f32 %v618, %v656
        %v665 = vmul.f32 %v620, %v657
        %v666 = vmul.f32 %v622, %v658
        %v667 = vmul.f32 %v624, %v659
        %v668 = vmul.f32 %v626, %v660
        %v669 = vmul.f32 %v628, %v661
        %v670 = vmul.f32 %v630, %v662
        %v672 = vsel %vm582, %v404, 0
        %v675 = vsel %vm582, %v405, 0
        %v678 = vsel %vm582, %v406, 0
        %v681 = vsel %vm582, %v407, 0
        %v684 = vsel %vm582, %v663, 0
        %v687 = vsel %vm582, %v664, 0
        %v690 = vsel %vm582, %v665, 0
        %v693 = vsel %vm582, %v666, 0
        %v696 = vsel %vm582, %v667, 0
        %v699 = vsel %vm582, %v668, 0
        %v702 = vsel %vm582, %v669, 0
        %v705 = vsel %vm582, %v670, 0
        %707 = vmatprep.subr.mxu0 0.0
        %708 = vmatpush1.xpose.msra.mxu0 %v684
        %709 = vmatprep.subr.mxu0 0.0
        %710 = vmatpush1.xpose.msra.mxu0 %v687
        %711 = vmatprep.subr.mxu0 0.0
        %712 = vmatpush1.xpose.msra.mxu0 %v690
        %713 = vmatprep.subr.mxu0 0.0
        %714 = vmatpush1.xpose.msra.mxu0 %v693
        %715 = vmatprep.subr.mxu0 0.0
        %716 = vmatpush1.xpose.msra.mxu0 %v696
        %717 = vmatprep.subr.mxu0 0.0
        %718 = vmatpush1.xpose.msra.mxu0 %v699
        %719 = vmatprep.subr.mxu0 0.0
        %720 = vmatpush1.xpose.msra.mxu0 %v702
        %721 = vmatprep.subr.mxu0 0.0
        %722 = vmatpush1.xpose.msra.mxu0 %v705
        %723 = vmatprep.subr.mxu0 0.0
        %724 = vmatpush1.xpose.msra.mxu0 0.0
        %725 = vmatprep.subr.mxu0 0.0
        %726 = vmatpush1.xpose.msra.mxu0 0.0
        %727 = vmatprep.subr.mxu0 0.0
        %728 = vmatpush1.xpose.msra.mxu0 0.0
        %729 = vmatprep.subr.mxu0 0.0
        %730 = vmatpush1.xpose.msra.mxu0 0.0
        %731 = vmatprep.subr.mxu0 0.0
        %732 = vmatpush1.xpose.msra.mxu0 0.0
        %733 = vmatprep.subr.mxu0 0.0
        %734 = vmatpush1.xpose.msra.mxu0 0.0
        %735 = vmatprep.subr.mxu0 0.0
        %736 = vmatpush1.xpose.msra.mxu0 0.0
        %737 = vmatprep.subr.mxu0 0.0
        %738 = vmatpush1.xpose.msra.mxu0 0.0
        %739 = vmatprep.subr.mxu0 0.0
        %740 = vmatpush1.xpose.msra.mxu0 0.0
        %741 = vmatprep.subr.mxu0 0.0
        %742 = vmatpush1.xpose.msra.mxu0 0.0
        %743 = vmatprep.subr.mxu0 0.0
        %744 = vmatpush1.xpose.msra.mxu0 0.0
        %745 = vmatprep.subr.mxu0 0.0
        %746 = vmatpush1.xpose.msra.mxu0 0.0
        %747 = vmatprep.subr.mxu0 0.0
        %748 = vmatpush1.xpose.msra.mxu0 0.0
        %749 = vmatprep.subr.mxu0 0.0
        %750 = vmatpush1.xpose.msra.mxu0 0.0
        %751 = vmatprep.subr.mxu0 0.0
        %752 = vmatpush1.xpose.msra.mxu0 0.0
        %753 = vmatprep.subr.mxu0 0.0
        %754 = vmatpush1.xpose.msra.mxu0 0.0
        %755 = vmatprep.subr.mxu0 0.0
        %756 = vmatpush1.xpose.msra.mxu0 0.0
        %757 = vmatprep.subr.mxu0 0.0
        %758 = vmatpush1.xpose.msra.mxu0 0.0
        %759 = vmatprep.subr.mxu0 0.0
        %760 = vmatpush1.xpose.msra.mxu0 0.0
        %761 = vmatprep.subr.mxu0 0.0
        %762 = vmatpush1.xpose.msra.mxu0 0.0
        %763 = vmatprep.subr.mxu0 0.0
        %764 = vmatpush1.xpose.msra.mxu0 0.0
        %765 = vmatprep.subr.mxu0 0.0
        %766 = vmatpush1.xpose.msra.mxu0 0.0
        %767 = vmatprep.subr.mxu0 0.0
        %768 = vmatpush1.xpose.msra.mxu0 0.0
        %769 = vmatprep.subr.mxu0 0.0
        %770 = vmatpush1.xpose.msra.mxu0 0.0
        %771 = vmatprep.mubr.f32.mxu0 0.0
        %772 = vmatmul.mubr.f32.gmra.mrb[0].mxu0 %v672
        %v773 = vpop.f32.mrb[0].mxu0
        %v774 = vadd.f32 0.0, %v773
        %v775 = vpop.f32.mrb[0].mxu0
        %776 = vmatprep.mubr.f32.mxu0 0.0
        %777 = vmatmul.mubr.f32.gmra.mrb[0].mxu0 %v675
        %v778 = vpop.f32.mrb[0].mxu0
        %v779 = vadd.f32 0.0, %v778
        %v780 = vpop.f32.mrb[0].mxu0
        %781 = vmatprep.mubr.f32.mxu0 0.0
        %782 = vmatmul.mubr.f32.gmra.mrb[0].mxu0 %v678
        %v783 = vpop.f32.mrb[0].mxu0
        %v784 = vadd.f32 0.0, %v783
        %v785 = vpop.f32.mrb[0].mxu0
        %786 = vmatprep.mubr.f32.mxu0 0.0
        %787 = vmatmul.mubr.f32.gmra.mrb[0].mxu0 %v681
        %v788 = vpop.f32.mrb[0].mxu0
        %v789 = vadd.f32 0.0, %v788
        %v790 = vpop.f32.mrb[0].mxu0
        %791 = vdwg.mxu0
        %792 = vst.msk [vmem:[%s383] sm:$0xff] %vm582, %v774
        %793 = vst.msk [vmem:[%s383 + $0x8] sm:$0xff] %vm582, %v779
        %794 = vst.msk [vmem:[%s383 + $0x10] sm:$0xff] %vm582, %v784
        %795 = vst.msk [vmem:[%s383 + $0x18] sm:$0xff] %vm582, %v789
        %796 = vxpose.xlu0.b32.start [1/16] %v416, 128
        %797 = vxpose.xlu0.b32.cont [2/16] %v417, 128
        %798 = vxpose.xlu0.b32.cont [3/16] %v418, 128
        %799 = vxpose.xlu0.b32.cont [4/16] %v419, 128
        %800 = vxpose.xlu0.b32.cont [5/16] 0.0, 128
        %801 = vxpose.xlu0.b32.cont [6/16] 0.0, 128
        %802 = vxpose.xlu0.b32.cont [7/16] 0.0, 128
        %803 = vxpose.xlu0.b32.cont [8/16] 0.0, 128
        %804 = vxpose.xlu0.b32.cont [9/16] 0.0, 128
        %805 = vxpose.xlu0.b32.cont [10/16] 0.0, 128
        %806 = vxpose.xlu0.b32.cont [11/16] 0.0, 128
        %807 = vxpose.xlu0.b32.cont [12/16] 0.0, 128
        %808 = vxpose.xlu0.b32.cont [13/16] 0.0, 128
        %809 = vxpose.xlu0.b32.cont [14/16] 0.0, 128
        %810 = vxpose.xlu0.b32.cont [15/16] 0.0, 128
        %811 = vxpose.xlu0.b32.end [16/16] 0.0, 128
        %v812 = vpop.trf.xlu0
        %v813 = vpop.trf.xlu0
        %v814 = vpop.trf.xlu0
        %v815 = vpop.trf.xlu0
        %v816 = vpop.trf.xlu0
        %v817 = vpop.trf.xlu0
        %v818 = vpop.trf.xlu0
        %v819 = vpop.trf.xlu0
        %v820 = vpop.trf.xlu0
        %v821 = vpop.trf.xlu0
        %v822 = vpop.trf.xlu0
        %v823 = vpop.trf.xlu0
        %v824 = vpop.trf.xlu0
        %v825 = vpop.trf.xlu0
        %v826 = vpop.trf.xlu0
        %v827 = vpop.trf.xlu0
        %v829 = vsel %vm452, %v812, 0
        %v832 = vsel %vm452, %v813, 0
        %v835 = vsel %vm452, %v814, 0
        %v838 = vsel %vm452, %v815, 0
        %v841 = vsel %vm452, %v816, 0
        %v844 = vsel %vm452, %v817, 0
        %v847 = vsel %vm452, %v818, 0
        %v850 = vsel %vm452, %v819, 0
        %852 = vmatprep.subr.mxu0 0.0
        %853 = vmatpush1.msra.mxu0 %v400
        %854 = vmatprep.subr.mxu0 0.0
        %855 = vmatpush1.msra.mxu0 %v401
        %856 = vmatprep.subr.mxu0 0.0
        %857 = vmatpush1.msra.mxu0 %v402
        %858 = vmatprep.subr.mxu0 0.0
        %859 = vmatpush1.msra.mxu0 %v403
        %860 = vmatprep.subr.mxu0 0.0
        %861 = vmatpush1.msra.mxu0 0.0
        %862 = vmatprep.subr.mxu0 0.0
        %863 = vmatpush1.msra.mxu0 0.0
        %864 = vmatprep.subr.mxu0 0.0
        %865 = vmatpush1.msra.mxu0 0.0
        %866 = vmatprep.subr.mxu0 0.0
        %867 = vmatpush1.msra.mxu0 0.0
        %868 = vmatprep.subr.mxu0 0.0
        %869 = vmatpush1.msra.mxu0 0.0
        %870 = vmatprep.subr.mxu0 0.0
        %871 = vmatpush1.msra.mxu0 0.0
        %872 = vmatprep.subr.mxu0 0.0
        %873 = vmatpush1.msra.mxu0 0.0
        %874 = vmatprep.subr.mxu0 0.0
        %875 = vmatpush1.msra.mxu0 0.0
        %876 = vmatprep.subr.mxu0 0.0
        %877 = vmatpush1.msra.mxu0 0.0
        %878 = vmatprep.subr.mxu0 0.0
        %879 = vmatpush1.msra.mxu0 0.0
        %880 = vmatprep.subr.mxu0 0.0
        %881 = vmatpush1.msra.mxu0 0.0
        %882 = vmatprep.subr.mxu0 0.0
        %883 = vmatpush1.msra.mxu0 0.0
        %884 = vmatprep.subr.mxu0 0.0
        %885 = vmatpush1.msra.mxu0 0.0
        %886 = vmatprep.subr.mxu0 0.0
        %887 = vmatpush1.msra.mxu0 0.0
        %888 = vmatprep.subr.mxu0 0.0
        %889 = vmatpush1.msra.mxu0 0.0
        %890 = vmatprep.subr.mxu0 0.0
        %891 = vmatpush1.msra.mxu0 0.0
        %892 = vmatprep.subr.mxu0 0.0
        %893 = vmatpush1.msra.mxu0 0.0
        %894 = vmatprep.subr.mxu0 0.0
        %895 = vmatpush1.msra.mxu0 0.0
        %896 = vmatprep.subr.mxu0 0.0
        %897 = vmatpush1.msra.mxu0 0.0
        %898 = vmatprep.subr.mxu0 0.0
        %899 = vmatpush1.msra.mxu0 0.0
        %900 = vmatprep.subr.mxu0 0.0
        %901 = vmatpush1.msra.mxu0 0.0
        %902 = vmatprep.subr.mxu0 0.0
        %903 = vmatpush1.msra.mxu0 0.0
        %904 = vmatprep.subr.mxu0 0.0
        %905 = vmatpush1.msra.mxu0 0.0
        %906 = vmatprep.subr.mxu0 0.0
        %907 = vmatpush1.msra.mxu0 0.0
        %908 = vmatprep.subr.mxu0 0.0
        %909 = vmatpush1.msra.mxu0 0.0
        %910 = vmatprep.subr.mxu0 0.0
        %911 = vmatpush1.msra.mxu0 0.0
        %912 = vmatprep.subr.mxu0 0.0
        %913 = vmatpush1.msra.mxu0 0.0
        %914 = vmatprep.subr.mxu0 0.0
        %915 = vmatpush1.msra.mxu0 0.0
        %916 = vmatprep.mubr.f32.mxu0 0.0
        %917 = vmatmul.mubr.f32.gmra.mrb[0].mxu0 %v829
        %v918 = vpop.f32.mrb[0].mxu0
        %v919 = vadd.f32 0.0, %v918
        %v920 = vpop.f32.mrb[0].mxu0
        %921 = vmatprep.mubr.f32.mxu0 0.0
        %922 = vmatmul.mubr.f32.gmra.mrb[0].mxu0 %v832
        %v923 = vpop.f32.mrb[0].mxu0
        %v924 = vadd.f32 0.0, %v923
        %v925 = vpop.f32.mrb[0].mxu0
        %926 = vmatprep.mubr.f32.mxu0 0.0
        %927 = vmatmul.mubr.f32.gmra.mrb[0].mxu0 %v835
        %v928 = vpop.f32.mrb[0].mxu0
        %v929 = vadd.f32 0.0, %v928
        %v930 = vpop.f32.mrb[0].mxu0
        %931 = vmatprep.mubr.f32.mxu0 0.0
        %932 = vmatmul.mubr.f32.gmra.mrb[0].mxu0 %v838
        %v933 = vpop.f32.mrb[0].mxu0
        %v934 = vadd.f32 0.0, %v933
        %v935 = vpop.f32.mrb[0].mxu0
        %936 = vmatprep.mubr.f32.mxu0 0.0
        %937 = vmatmul.mubr.f32.gmra.mrb[0].mxu0 %v841
        %v938 = vpop.f32.mrb[0].mxu0
        %v939 = vadd.f32 0.0, %v938
        %v940 = vpop.f32.mrb[0].mxu0
        %941 = vmatprep.mubr.f32.mxu0 0.0
        %942 = vmatmul.mubr.f32.gmra.mrb[0].mxu0 %v844
        %v943 = vpop.f32.mrb[0].mxu0
        %v944 = vadd.f32 0.0, %v943
        %v945 = vpop.f32.mrb[0].mxu0
        %946 = vmatprep.mubr.f32.mxu0 0.0
        %947 = vmatmul.mubr.f32.gmra.mrb[0].mxu0 %v847
        %v948 = vpop.f32.mrb[0].mxu0
        %v949 = vadd.f32 0.0, %v948
        %v950 = vpop.f32.mrb[0].mxu0
        %951 = vmatprep.mubr.f32.mxu0 0.0
        %952 = vmatmul.mubr.f32.gmra.mrb[0].mxu0 %v850
        %v953 = vpop.f32.mrb[0].mxu0
        %v954 = vadd.f32 0.0, %v953
        %v955 = vpop.f32.mrb[0].mxu0
        %956 = vdwg.mxu0
        %v957 = vsel %vm582, %v919, -inf
        %958 = vmax.xlane.f32.xlu0 %v957
        %v959 = vpop.xlane.xlu0 %958
        %v960 = vsel %vm582, %v924, -inf
        %961 = vmax.xlane.f32.xlu0 %v960
        %v962 = vpop.xlane.xlu0 %961
        %v963 = vsel %vm582, %v929, -inf
        %964 = vmax.xlane.f32.xlu0 %v963
        %v965 = vpop.xlane.xlu0 %964
        %v966 = vsel %vm582, %v934, -inf
        %967 = vmax.xlane.f32.xlu0 %v966
        %v968 = vpop.xlane.xlu0 %967
        %v969 = vsel %vm582, %v939, -inf
        %970 = vmax.xlane.f32.xlu0 %v969
        %v971 = vpop.xlane.xlu0 %970
        %v972 = vsel %vm582, %v944, -inf
        %973 = vmax.xlane.f32.xlu0 %v972
        %v974 = vpop.xlane.xlu0 %973
        %v975 = vsel %vm582, %v949, -inf
        %976 = vmax.xlane.f32.xlu0 %v975
        %v977 = vpop.xlane.xlu0 %976
        %v978 = vsel %vm582, %v954, -inf
        %979 = vmax.xlane.f32.xlu0 %v978
        %v980 = vpop.xlane.xlu0 %979
        %v981 = vsub.f32 %v919, %v959
        %v982 = vsub.f32 %v924, %v962
        %v983 = vsub.f32 %v929, %v965
        %v984 = vsub.f32 %v934, %v968
        %v985 = vsub.f32 %v939, %v971
        %v986 = vsub.f32 %v944, %v974
        %v987 = vsub.f32 %v949, %v977
        %v988 = vsub.f32 %v954, %v980
        %v989 = vmul.f32 %v981, 1.442695
        %v990 = vpow.pop %v989
        %v991 = vmul.f32 %v982, 1.442695
        %v992 = vpow.pop %v991
        %v993 = vmul.f32 %v983, 1.442695
        %v994 = vpow.pop %v993
        %v995 = vmul.f32 %v984, 1.442695
        %v996 = vpow.pop %v995
        %v997 = vmul.f32 %v985, 1.442695
        %v998 = vpow.pop %v997
        %v999 = vmul.f32 %v986, 1.442695
        %v1000 = vpow.pop %v999
        %v1001 = vmul.f32 %v987, 1.442695
        %v1002 = vpow.pop %v1001
        %v1003 = vmul.f32 %v988, 1.442695
        %v1004 = vpow.pop %v1003
        %v1005 = vsel %vm582, %v990, 0.0
        %1006 = vadd.xlane.f32.xlu0 %v1005
        %v1007 = vpop.xlane.xlu0 %1006
        %v1008 = vsel %vm582, %v992, 0.0
        %1009 = vadd.xlane.f32.xlu0 %v1008
        %v1010 = vpop.xlane.xlu0 %1009
        %v1011 = vsel %vm582, %v994, 0.0
        %1012 = vadd.xlane.f32.xlu0 %v1011
        %v1013 = vpop.xlane.xlu0 %1012
        %v1014 = vsel %vm582, %v996, 0.0
        %1015 = vadd.xlane.f32.xlu0 %v1014
        %v1016 = vpop.xlane.xlu0 %1015
        %v1017 = vsel %vm582, %v998, 0.0
        %1018 = vadd.xlane.f32.xlu0 %v1017
        %v1019 = vpop.xlane.xlu0 %1018
        %v1020 = vsel %vm582, %v1000, 0.0
        %1021 = vadd.xlane.f32.xlu0 %v1020
        %v1022 = vpop.xlane.xlu0 %1021
        %v1023 = vsel %vm582, %v1002, 0.0
        %1024 = vadd.xlane.f32.xlu0 %v1023
        %v1025 = vpop.xlane.xlu0 %1024
        %v1026 = vsel %vm582, %v1004, 0.0
        %1027 = vadd.xlane.f32.xlu0 %v1026
        %v1028 = vpop.xlane.xlu0 %1027
        %v1029 = vrcp.pop %v1007
        %v1030 = vrcp.pop %v1010
        %v1031 = vrcp.pop %v1013
        %v1032 = vrcp.pop %v1016
        %v1033 = vrcp.pop %v1019
        %v1034 = vrcp.pop %v1022
        %v1035 = vrcp.pop %v1025
        %v1036 = vrcp.pop %v1028
        %v1037 = vmul.f32 %v990, %v1029
        %v1038 = vmul.f32 %v992, %v1030
        %v1039 = vmul.f32 %v994, %v1031
        %v1040 = vmul.f32 %v996, %v1032
        %v1041 = vmul.f32 %v998, %v1033
        %v1042 = vmul.f32 %v1000, %v1034
        %v1043 = vmul.f32 %v1002, %v1035
        %v1044 = vmul.f32 %v1004, %v1036
        %v1046 = vsel %vm582, %v408, 0
        %v1049 = vsel %vm582, %v409, 0
        %v1052 = vsel %vm582, %v410, 0
        %v1055 = vsel %vm582, %v411, 0
        %v1058 = vsel %vm582, %v1037, 0
        %v1061 = vsel %vm582, %v1038, 0
        %v1064 = vsel %vm582, %v1039, 0
        %v1067 = vsel %vm582, %v1040, 0
        %v1070 = vsel %vm582, %v1041, 0
        %v1073 = vsel %vm582, %v1042, 0
        %v1076 = vsel %vm582, %v1043, 0
        %v1079 = vsel %vm582, %v1044, 0
        %1081 = vmatprep.subr.mxu0 0.0
        %1082 = vmatpush1.xpose.msra.mxu0 %v1058
        %1083 = vmatprep.subr.mxu0 0.0
        %1084 = vmatpush1.xpose.msra.mxu0 %v1061
        %1085 = vmatprep.subr.mxu0 0.0
        %1086 = vmatpush1.xpose.msra.mxu0 %v1064
        %1087 = vmatprep.subr.mxu0 0.0
        %1088 = vmatpush1.xpose.msra.mxu0 %v1067
        %1089 = vmatprep.subr.mxu0 0.0
        %1090 = vmatpush1.xpose.msra.mxu0 %v1070
        %1091 = vmatprep.subr.mxu0 0.0
        %1092 = vmatpush1.xpose.msra.mxu0 %v1073
        %1093 = vmatprep.subr.mxu0 0.0
        %1094 = vmatpush1.xpose.msra.mxu0 %v1076
        %1095 = vmatprep.subr.mxu0 0.0
        %1096 = vmatpush1.xpose.msra.mxu0 %v1079
        %1097 = vmatprep.subr.mxu0 0.0
        %1098 = vmatpush1.xpose.msra.mxu0 0.0
        %1099 = vmatprep.subr.mxu0 0.0
        %1100 = vmatpush1.xpose.msra.mxu0 0.0
        %1101 = vmatprep.subr.mxu0 0.0
        %1102 = vmatpush1.xpose.msra.mxu0 0.0
        %1103 = vmatprep.subr.mxu0 0.0
        %1104 = vmatpush1.xpose.msra.mxu0 0.0
        %1105 = vmatprep.subr.mxu0 0.0
        %1106 = vmatpush1.xpose.msra.mxu0 0.0
        %1107 = vmatprep.subr.mxu0 0.0
        %1108 = vmatpush1.xpose.msra.mxu0 0.0
        %1109 = vmatprep.subr.mxu0 0.0
        %1110 = vmatpush1.xpose.msra.mxu0 0.0
        %1111 = vmatprep.subr.mxu0 0.0
        %1112 = vmatpush1.xpose.msra.mxu0 0.0
        %1113 = vmatprep.subr.mxu0 0.0
        %1114 = vmatpush1.xpose.msra.mxu0 0.0
        %1115 = vmatprep.subr.mxu0 0.0
        %1116 = vmatpush1.xpose.msra.mxu0 0.0
        %1117 = vmatprep.subr.mxu0 0.0
        %1118 = vmatpush1.xpose.msra.mxu0 0.0
        %1119 = vmatprep.subr.mxu0 0.0
        %1120 = vmatpush1.xpose.msra.mxu0 0.0
        %1121 = vmatprep.subr.mxu0 0.0
        %1122 = vmatpush1.xpose.msra.mxu0 0.0
        %1123 = vmatprep.subr.mxu0 0.0
        %1124 = vmatpush1.xpose.msra.mxu0 0.0
        %1125 = vmatprep.subr.mxu0 0.0
        %1126 = vmatpush1.xpose.msra.mxu0 0.0
        %1127 = vmatprep.subr.mxu0 0.0
        %1128 = vmatpush1.xpose.msra.mxu0 0.0
        %1129 = vmatprep.subr.mxu0 0.0
        %1130 = vmatpush1.xpose.msra.mxu0 0.0
        %1131 = vmatprep.subr.mxu0 0.0
        %1132 = vmatpush1.xpose.msra.mxu0 0.0
        %1133 = vmatprep.subr.mxu0 0.0
        %1134 = vmatpush1.xpose.msra.mxu0 0.0
        %1135 = vmatprep.subr.mxu0 0.0
        %1136 = vmatpush1.xpose.msra.mxu0 0.0
        %1137 = vmatprep.subr.mxu0 0.0
        %1138 = vmatpush1.xpose.msra.mxu0 0.0
        %1139 = vmatprep.subr.mxu0 0.0
        %1140 = vmatpush1.xpose.msra.mxu0 0.0
        %1141 = vmatprep.subr.mxu0 0.0
        %1142 = vmatpush1.xpose.msra.mxu0 0.0
        %1143 = vmatprep.subr.mxu0 0.0
        %1144 = vmatpush1.xpose.msra.mxu0 0.0
        %1145 = vmatprep.mubr.f32.mxu0 0.0
        %1146 = vmatmul.mubr.f32.gmra.mrb[0].mxu0 %v1046
        %v1147 = vpop.f32.mrb[0].mxu0
        %v1148 = vadd.f32 0.0, %v1147
        %v1149 = vpop.f32.mrb[0].mxu0
        %1150 = vmatprep.mubr.f32.mxu0 0.0
        %1151 = vmatmul.mubr.f32.gmra.mrb[0].mxu0 %v1049
        %v1152 = vpop.f32.mrb[0].mxu0
        %v1153 = vadd.f32 0.0, %v1152
        %v1154 = vpop.f32.mrb[0].mxu0
        %1155 = vmatprep.mubr.f32.mxu0 0.0
        %1156 = vmatmul.mubr.f32.gmra.mrb[0].mxu0 %v1052
        %v1157 = vpop.f32.mrb[0].mxu0
        %v1158 = vadd.f32 0.0, %v1157
        %v1159 = vpop.f32.mrb[0].mxu0
        %1160 = vmatprep.mubr.f32.mxu0 0.0
        %1161 = vmatmul.mubr.f32.gmra.mrb[0].mxu0 %v1055
        %v1162 = vpop.f32.mrb[0].mxu0
        %v1163 = vadd.f32 0.0, %v1162
        %v1164 = vpop.f32.mrb[0].mxu0
        %1165 = vdwg.mxu0
        %s1166 = scalar_lea.vmem %s383, 32 [#allocation8]
        %1167 = vst.msk [vmem:[%s1166] sm:$0xff] %vm582, %v1148
        %1168 = vst.msk [vmem:[%s1166 + $0x8] sm:$0xff] %vm582, %v1153
        %1169 = vst.msk [vmem:[%s1166 + $0x10] sm:$0xff] %vm582, %v1158
        %1170 = vst.msk [vmem:[%s1166 + $0x18] sm:$0xff] %vm582, %v1163
        %s1171 = sand.u32 %s140, 1
        %s1172 = scalar_lea.sflag [#allocation4], %s1171
        %s1173 = sand.u32 %s140, 1
        %s1174 = smul.addr %s1173, 64
        %s1175 = scalar_lea.vmem [#allocation8], %s1174
        // Predicated region
        $region45: #{tpu_custom_call.1} parent=31 // pred_check
          %p1176 = pneg %p150
        $region46: #{tpu_custom_call.1} parent=31 // pred_check_branch
          %1178 = sbr.rel (%p1176) target = $region48
        $region47: #{tpu_custom_call.1} parent=31 // pred_region
          %s1179 = smul.u32 2, %s29
          %s1181 = ssub.s32 1024, 1024
          %1182 = vsyncadd %s1172, %s1181
          %s1183 = smul.addr %s1179, 4
          %s1184 = sadd.s32 %s30, %s1183
          %s1185 = smul.addr %s28, 8
          %s1186 = sadd.s32 %s1184, %s1185
          %s1187 = smul.addr %s1186, 128
          %s1188 = scalar_lea.hbm %s3, %s1187
          %s1189 = sshll.u32 %s1175, 4
          %s1190 = int_to_ptr.vmem [resolvable:$true] %s1189
          %1195 = dma.vmem_to_hbm [thread:$0]  %s1190, 1024, %s1188, %s1172, 128, 128, 8
        $region48: #{tpu_custom_call.1} parent=31 // pred_fallthru
          _
      $region32: #{tpu_custom_call.1} parent=5 // pred_fallthru
        _
      %p1196 = scmp.le.s32.totalorder 2, %s18
      // Predicated region
      $region49: #{tpu_custom_call.1} parent=5 // pred_check
        %p1197 = pneg %p1196
      $region50: #{tpu_custom_call.1} parent=5 // pred_check_branch
        %1199 = sbr.rel (%p1197) target = $region52
      $region51: #{tpu_custom_call.1} parent=5 // pred_region
        %s1200 = ssub.s32 %s18, 2
        // Predicated region
        $region53: #{tpu_custom_call.1} parent=51 // pred_check
          %p1201 = pneg %p156
        $region54: #{tpu_custom_call.1} parent=51 // pred_check_branch
          %1203 = sbr.rel (%p1201) target = $region56
        $region55: #{tpu_custom_call.1} parent=51 // pred_region
          %s1204 = sand.u32 %s141, 1
          %s1205 = scalar_lea.sflag [#allocation4], %s1204
          %s1206 = sand.u32 %s141, 1
          %s1207 = smul.addr %s1206, 64
          %s1208 = scalar_lea.vmem [#allocation8], %s1207
          %1209 = dma.done %s1205, 1024
        $region56: #{tpu_custom_call.1} parent=51 // pred_fallthru
          _
      $region52: #{tpu_custom_call.1} parent=5 // pred_fallthru
        _
    $region6: #{tpu_custom_call.1} parent=1 // loop_footer
      %s22 = sadd.s32 1, %s18
    $region7: #{tpu_custom_call.1} parent=1 // loop_footer_branch
      %17 = sbr.rel target = $region3
    $region8: #{tpu_custom_call.1} parent=1 // loop_exit
      _
    %1210 = vsyncpa [#allocation3], 1
    %s1211 = scalar_lea.sflag [#allocation3], 1
    %1212 = vsyncpa %s1211, 1
    %1213 = vsyncpa [#allocation6], 1
    %s1214 = scalar_lea.sflag [#allocation6], 1
    %1215 = vsyncpa %s1214, 1
    %1216 = vsyncpa [#allocation4], 1
    %s1217 = scalar_lea.sflag [#allocation4], 1
    %1218 = vsyncpa %s1217, 1

</llo_original>
